<compile_context>
chip_gen: v6e
topology: v6e:2x2x1
jax: 0.10.0
libtpu: 0.0.40
codegen_flags: <defaults>
</compile_context>

<pallas_src>
import functools

import jax
import jax.numpy as jnp
from jax import lax
from jax.experimental import pallas as pl
from jax.experimental.pallas import tpu as pltpu

LANE = 128
SUBLANE = 8


def _round_up(x, m):
    return (x + m - 1) // m * m


def _cdiv(a, b):
    return (a + b - 1) // b


def _vmem_capacity_bytes():
    """Per-TensorCore VMEM capacity; conservative fallback if unknown."""
    try:
        cap = getattr(pltpu.get_tpu_info(), "vmem_capacity_bytes", None)
        if cap:
            return int(cap)
    except Exception:
        pass
    return 64 << 20  # v7x per-core size; safe lower bound for v5e/v6e as well.


# --------------------------------------------------------------------------- #
# Kernel
# --------------------------------------------------------------------------- #
def _dcnv2_kernel(n_cross, n_deep, compute_dtype, *refs):
    # refs layout:
    #   x,
    #   [cross_w_i, cross_b_i] * n_cross,
    #   [deep_w_i,  deep_b_i ] * n_deep,
    #   head_w_cross_T, head_w_deep_T, head_b_T,
    #   out   (shape = (num_classes, TILE_B): lane-dense over batch)
    idx = 0
    x_ref = refs[idx]; idx += 1
    cross = [(refs[idx + 2 * i], refs[idx + 2 * i + 1]) for i in range(n_cross)]
    idx += 2 * n_cross
    deep = [(refs[idx + 2 * i], refs[idx + 2 * i + 1]) for i in range(n_deep)]
    idx += 2 * n_deep
    hwc_ref, hwd_ref, hb_ref, out_ref = refs[idx:idx + 4]

    x0 = x_ref[...].astype(jnp.float32)

    # CrossNetwork: x_{k+1} = x0 * relu(W_k x_k + b_k) + x_k
    # (elementwise math in f32; only the matmul operands are cast to compute_dtype)
    xc = x0
    for w_ref, b_ref in cross:
        h = jnp.dot(xc.astype(compute_dtype), w_ref[...],
                    preferred_element_type=jnp.float32) + b_ref[...]
        xc = x0 * jnp.maximum(h, 0.0) + xc

    # Head contribution of the cross branch, computed TRANSPOSED so the final
    # output store is lane-dense over batch. Done right here so xc's live range
    # ends before the deep stack runs (less VMEM pressure for large tiles).
    dn = (((1,), (1,)), ((), ()))  # contract the feature axis of both operands
    y_t = lax.dot_general(hwc_ref[...], xc.astype(compute_dtype), dn,
                          preferred_element_type=jnp.float32) + hb_ref[...]

    # Deep network ("parallel" mode -> operates on the raw input x0).
    d = x0
    for w_ref, b_ref in deep:
        h = jnp.dot(d.astype(compute_dtype), w_ref[...],
                    preferred_element_type=jnp.float32) + b_ref[...]
        d = jnp.maximum(h, 0.0)

    y_t = y_t + lax.dot_general(hwd_ref[...], d.astype(compute_dtype), dn,
                                preferred_element_type=jnp.float32)
    out_ref[...] = jax.nn.sigmoid(y_t).astype(out_ref.dtype)


# --------------------------------------------------------------------------- #
# One-time parameter preparation (cast / transpose / split head) — no per-call
# HBM pass over the weights.
# --------------------------------------------------------------------------- #
def prepare_dcnv2(params, *, compute_dtype=jnp.bfloat16):
    cross = params["cross"]
    deep = params["deep"]
    head_w, head_b = params["head"]

    if cross:
        dim_in = cross[0][0].shape[0]
    elif deep:
        dim_in = deep[0][0].shape[0]
    else:
        raise ValueError("DCNV2 needs at least one cross or deep layer")
    num_classes = head_w.shape[1]
    deep_out = [w.shape[1] for w, _ in deep]
    deep_last = deep_out[-1] if deep else dim_in

    cast_w = lambda w: w.astype(compute_dtype)
    cast_b = lambda b: b.astype(jnp.float32).reshape(1, -1)

    cross_p = [(cast_w(w), cast_b(b)) for w, b in cross]
    deep_p = [(cast_w(w), cast_b(b)) for w, b in deep]

    # Head weight is stored (in_dim, num_classes); split cross/deep parts and
    # transpose to (num_classes, K) so the kernel emits (num_classes, TILE_B).
    hwc = cast_w(head_w[:dim_in].T)            # (num_classes, dim_in)
    hwd = cast_w(head_w[dim_in:].T)            # (num_classes, deep_last)
    hb = head_b.astype(jnp.float32).reshape(num_classes, 1)

    flat = [a for pair in (cross_p + deep_p) for a in pair] + [hwc, hwd, hb]
    weight_hbm_bytes = sum(int(a.size) * a.dtype.itemsize for a in flat)

    def tile_bytes(a):  # VMEM footprint after internal (8,128) tiling
        r, c = a.shape
        return _round_up(max(r, 1), SUBLANE) * _round_up(max(c, 1), LANE) * a.dtype.itemsize

    weight_vmem_bytes = sum(tile_bytes(a) for a in flat)

    dim_p = _round_up(dim_in, LANE)
    deep_out_p = [_round_up(v, LANE) for v in deep_out]
    max_feat = max([dim_p] + deep_out_p)

    return dict(
        compute_dtype=compute_dtype,
        dim_in=dim_in,
        num_classes=num_classes,
        deep_dims=[(w.shape[0], w.shape[1]) for w, _ in deep],
        deep_last=deep_last,
        dim_p=dim_p,
        max_feat=max_feat,
        weight_hbm_bytes=weight_hbm_bytes,
        weight_vmem_bytes=weight_vmem_bytes,
        cross=cross_p,
        deep=deep_p,
        head=(hwc, hwd, hb),
    )


# --------------------------------------------------------------------------- #
# Forward wrapper
# --------------------------------------------------------------------------- #
def dcnv2_forward(x, prepared, *, tile_b=512):
    """DCNV2 forward on prepared params. Returns (batch, num_classes) float32."""
    batch, dim_in = x.shape
    assert dim_in == prepared["dim_in"], "input feature dim mismatch"

    num_classes = prepared["num_classes"]
    compute_dtype = prepared["compute_dtype"]
    dim_p = prepared["dim_p"]
    max_feat = prepared["max_feat"]
    cross_p = prepared["cross"]
    deep_p = prepared["deep"]
    hwc, hwd, hb = prepared["head"]
    n_cross, n_deep = len(cross_p), len(deep_p)

    x_item = x.dtype.itemsize
    vmem_cap = _vmem_capacity_bytes()
    budget = int(vmem_cap * 0.8)

    def est_vmem(tb):
        acts = tb * 4 * (3 * dim_p + 3 * max_feat)            # live f32 activations
        io = 2 * tb * _round_up(dim_in, LANE) * x_item + 2 * num_classes * _round_up(tb, LANE) * 4
        return 2 * prepared["weight_vmem_bytes"] + acts + io + (4 << 20)

    # Batch tile: large (>=512 reaches ~85% of HBM roofline vs ~29% at 128),
    # kept a multiple of 128 so the lane-dense transposed output block stays
    # legal with a multi-step grid, and shrunk if the per-core VMEM budget
    # (64 MiB on v7x) would be exceeded.
    tb_grid = max(LANE, (int(tile_b) // LANE) * LANE)
    while tb_grid > LANE and est_vmem(tb_grid) > budget:
        tb_grid //= 2
    tb = batch if batch <= tb_grid else tb_grid
    steps = _cdiv(batch, tb)
    # NOTE(v7x): the "parallel" batch axis is sharded across 2 TensorCores; an
    # odd step count > 1 leaves one core slightly underused, but balancing it
    # would need a non-128-multiple tile, so the imbalance is accepted here.

    inputs = ([x]
              + [a for pair in cross_p for a in pair]
              + [a for pair in deep_p for a in pair]
              + [hwc, hwd, hb])

    # Cost estimate (matmul FLOPs dominate; sigmoid -> transcendentals).
    mm_flops = (n_cross * dim_in * dim_in
                + sum(r * c for r, c in prepared["deep_dims"])
                + num_classes * (dim_in + prepared["deep_last"]))
    cost = pl.CostEstimate(
        flops=int(2 * steps * tb * mm_flops),
        transcendentals=int(batch * num_classes),
        bytes_accessed=int(batch * dim_in * x_item
                           + prepared["weight_hbm_bytes"]
                           + batch * num_classes * 4))

    vmem_limit = int(min(max(est_vmem(tb), 32 << 20), int(vmem_cap * 0.9)))

    kernel = functools.partial(_dcnv2_kernel, n_cross, n_deep, compute_dtype)
    out_shape = jax.ShapeDtypeStruct((num_classes, batch), jnp.float32)

    def run(weight_mode):
        def wspec(shape):
            if weight_mode is None:
                return pl.BlockSpec(shape, lambda i: (0, 0))
            return pl.BlockSpec(shape, lambda i: (0, 0), pipeline_mode=weight_mode)

        in_specs = [pl.BlockSpec((tb, dim_in), lambda i: (i, 0))]
        in_specs += [wspec(a.shape) for a in inputs[1:]]
        out_specs = pl.BlockSpec((num_classes, tb), lambda i: (0, i))

        return pl.pallas_call(
            kernel,
            grid=(steps,),
            out_shape=out_shape,
            in_specs=in_specs,
            out_specs=out_specs,
            compiler_params=pltpu.CompilerParams(
                dimension_semantics=("parallel",),
                vmem_limit_bytes=vmem_limit),
            cost_estimate=cost,
        )(*inputs)

    try:
        # Weights/biases never change block index -> single resident VMEM buffer.
        out_t = run(pl.Buffered(1))
    except Exception:
        # Fallback: default double-buffering (correct, just 2x weight VMEM).
        out_t = run(None)

    # (num_classes, batch) -> (batch, num_classes)
    return out_t.T


# --------------------------------------------------------------------------- #
# Init + pure-JAX reference
# --------------------------------------------------------------------------- #
def _init_linear(key, dim_in, dim_out):
    """PyTorch nn.Linear-style init; weight already transposed to (in, out)."""
    kw, kb = jax.random.split(key)
    bound = 1.0 / (dim_in ** 0.5)
    w = jax.random.uniform(kw, (dim_in, dim_out), jnp.float32, -bound, bound)
    b = jax.random.uniform(kb, (1, dim_out), jnp.float32, -bound, bound)
    return w, b


def init_dcnv2_params(key, dim_in, cross_layer_num, deep_hidden_dims, num_classes):
    keys = jax.random.split(key, cross_layer_num + len(deep_hidden_dims) + 1)
    k_iter = iter(keys)

    cross = [_init_linear(next(k_iter), dim_in, dim_in) for _ in range(cross_layer_num)]

    deep = []
    dims = [dim_in] + list(deep_hidden_dims)
    for i in range(len(dims) - 1):
        deep.append(_init_linear(next(k_iter), dims[i], dims[i + 1]))

    out_dim = dim_in + deep_hidden_dims[-1]  # parallel mode
    head = _init_linear(next(k_iter), out_dim, num_classes)

    return {"cross": cross, "deep": deep, "head": head}


def dcnv2_reference(x, params):
    """Pure-JAX reference of the same forward (for verification)."""
    x0 = x
    xc = x0
    for w, b in params["cross"]:
        xc = x0 * jnp.maximum(xc @ w + b, 0.0) + xc
    d = x0
    for w, b in params["deep"]:
        d = jnp.maximum(d @ w + b, 0.0)
    hw, hb = params["head"]
    y = jnp.concatenate([xc, d], axis=1) @ hw + hb
    return jax.nn.sigmoid(y)


if __name__ == "__main__":
    dim_in = 32
    cross_layer_num = 2
    deep_hidden_dims = [64, 32]
    num_classes = 1

    key = jax.random.PRNGKey(0)
    k_x, k_p, k_x2 = jax.random.split(key, 3)
    params = init_dcnv2_params(k_p, dim_in, cross_layer_num, deep_hidden_dims,
                               num_classes)

    # Weights are cast / transposed ONCE and reused across forward calls.
    prep_f32 = prepare_dcnv2(params, compute_dtype=jnp.float32)
    prep_bf16 = prepare_dcnv2(params)  # default: bf16 matmul operands

    # Small batch: single block, exact f32 check.
    x_small = jax.random.normal(k_x, (8, dim_in), jnp.float32)
    ref_small = dcnv2_reference(x_small, params)
    out_small = jax.block_until_ready(dcnv2_forward(x_small, prep_f32))
    assert out_small.shape == (8, num_classes)
    assert jnp.allclose(out_small, ref_small, atol=1e-5, rtol=1e-5), "f32 small-batch mismatch"

    # Larger batch, tile_b=128 to force a multi-step grid with a partial last tile.
    x_big = jax.random.normal(k_x2, (300, dim_in), jnp.float32)
    ref_big = dcnv2_reference(x_big, params)

    out_f32 = jax.block_until_ready(dcnv2_forward(x_big, prep_f32, tile_b=128))
    assert out_f32.shape == (300, num_classes)
    assert jnp.allclose(out_f32, ref_big, atol=1e-5, rtol=1e-5), "f32 gridded mismatch"

    # Default config: bf16 MXU operands (f32 accumulation), single 300-row block.
    out_bf16 = jax.block_until_ready(dcnv2_forward(x_big, prep_bf16))
    assert out_bf16.shape == (300, num_classes)
    assert float(jnp.max(jnp.abs(out_bf16 - ref_big))) < 5e-2, "bf16 mismatch"

    print("KERNEL_OK")
</pallas_src>

<mosaic_0001>
module attributes {stable_mosaic.version = 11 : i64} {
  func.func @_dcnv2_kernel(%arg0: i32, %arg1: memref<8x32xf32, #tpu.memory_space<vmem>>, %arg2: memref<32x32xf32, #tpu.memory_space<vmem>>, %arg3: memref<1x32xf32, #tpu.memory_space<vmem>>, %arg4: memref<32x32xf32, #tpu.memory_space<vmem>>, %arg5: memref<1x32xf32, #tpu.memory_space<vmem>>, %arg6: memref<32x64xf32, #tpu.memory_space<vmem>>, %arg7: memref<1x64xf32, #tpu.memory_space<vmem>>, %arg8: memref<64x32xf32, #tpu.memory_space<vmem>>, %arg9: memref<1x32xf32, #tpu.memory_space<vmem>>, %arg10: memref<1x32xf32, #tpu.memory_space<vmem>>, %arg11: memref<1x32xf32, #tpu.memory_space<vmem>>, %arg12: memref<1x1xf32, #tpu.memory_space<vmem>>, %arg13: memref<1x8xf32, #tpu.memory_space<vmem>>) attributes {dimension_semantics = [#tpu.dimension_semantics<parallel>], iteration_bounds = array<i64: 1>, scalar_prefetch = 0 : i64, scratch_operands = 0 : i64, tpu.core_type = #tpu.core_type<tc>, window_params = [{transform_indices = @transform_0, window_bounds = array<i64: 8, 32>}, {pipeline_mode = #tpu.pipeline_mode<synchronous>, transform_indices = @transform_1, window_bounds = array<i64: 32, 32>}, {pipeline_mode = #tpu.pipeline_mode<synchronous>, transform_indices = @transform_2, window_bounds = array<i64: 1, 32>}, {pipeline_mode = #tpu.pipeline_mode<synchronous>, transform_indices = @transform_3, window_bounds = array<i64: 32, 32>}, {pipeline_mode = #tpu.pipeline_mode<synchronous>, transform_indices = @transform_4, window_bounds = array<i64: 1, 32>}, {pipeline_mode = #tpu.pipeline_mode<synchronous>, transform_indices = @transform_5, window_bounds = array<i64: 32, 64>}, {pipeline_mode = #tpu.pipeline_mode<synchronous>, transform_indices = @transform_6, window_bounds = array<i64: 1, 64>}, {pipeline_mode = #tpu.pipeline_mode<synchronous>, transform_indices = @transform_7, window_bounds = array<i64: 64, 32>}, {pipeline_mode = #tpu.pipeline_mode<synchronous>, transform_indices = @transform_8, window_bounds = array<i64: 1, 32>}, {pipeline_mode = #tpu.pipeline_mode<synchronous>, transform_indices = @transform_9, window_bounds = array<i64: 1, 32>}, {pipeline_mode = #tpu.pipeline_mode<synchronous>, transform_indices = @transform_10, window_bounds = array<i64: 1, 32>}, {pipeline_mode = #tpu.pipeline_mode<synchronous>, transform_indices = @transform_11, window_bounds = array<i64: 1, 1>}, {transform_indices = @transform_12, window_bounds = array<i64: 1, 8>}]} {
    %c0 = arith.constant 0 : index
    %c0_0 = arith.constant 0 : index
    %0 = vector.load %arg1[%c0, %c0_0] : memref<8x32xf32, #tpu.memory_space<vmem>>, vector<8x32xf32>
    %c0_1 = arith.constant 0 : index
    %c0_2 = arith.constant 0 : index
    %1 = vector.load %arg2[%c0_1, %c0_2] : memref<32x32xf32, #tpu.memory_space<vmem>>, vector<32x32xf32>
    %cst = arith.constant dense<0.000000e+00> : vector<8x32xf32>
    %2 = tpu.matmul %0, %1, %cst {dimension_numbers = #tpu.dot_dimension_numbers<[1], [0], [0], [1], [0, 0, 1, 1], [], []>} : vector<8x32xf32>, vector<32x32xf32>, vector<8x32xf32> -> vector<8x32xf32>
    %c0_3 = arith.constant 0 : index
    %c0_4 = arith.constant 0 : index
    %3 = vector.load %arg3[%c0_3, %c0_4] : memref<1x32xf32, #tpu.memory_space<vmem>>, vector<1x32xf32>
    %4 = vector.broadcast %3 : vector<1x32xf32> to vector<8x32xf32>
    %5 = arith.addf %2, %4 : vector<8x32xf32>
    %cst_5 = arith.constant 0.000000e+00 : f32
    %6 = vector.broadcast %cst_5 : f32 to vector<8x32xf32>
    %7 = arith.maximumf %5, %6 : vector<8x32xf32>
    %8 = arith.mulf %0, %7 : vector<8x32xf32>
    %9 = arith.addf %8, %0 : vector<8x32xf32>
    %c0_6 = arith.constant 0 : index
    %c0_7 = arith.constant 0 : index
    %10 = vector.load %arg4[%c0_6, %c0_7] : memref<32x32xf32, #tpu.memory_space<vmem>>, vector<32x32xf32>
    %cst_8 = arith.constant dense<0.000000e+00> : vector<8x32xf32>
    %11 = tpu.matmul %9, %10, %cst_8 {dimension_numbers = #tpu.dot_dimension_numbers<[1], [0], [0], [1], [0, 0, 1, 1], [], []>} : vector<8x32xf32>, vector<32x32xf32>, vector<8x32xf32> -> vector<8x32xf32>
    %c0_9 = arith.constant 0 : index
    %c0_10 = arith.constant 0 : index
    %12 = vector.load %arg5[%c0_9, %c0_10] : memref<1x32xf32, #tpu.memory_space<vmem>>, vector<1x32xf32>
    %13 = vector.broadcast %12 : vector<1x32xf32> to vector<8x32xf32>
    %14 = arith.addf %11, %13 : vector<8x32xf32>
    %cst_11 = arith.constant 0.000000e+00 : f32
    %15 = vector.broadcast %cst_11 : f32 to vector<8x32xf32>
    %16 = arith.maximumf %14, %15 : vector<8x32xf32>
    %17 = arith.mulf %0, %16 : vector<8x32xf32>
    %18 = arith.addf %17, %9 : vector<8x32xf32>
    %c0_12 = arith.constant 0 : index
    %c0_13 = arith.constant 0 : index
    %19 = vector.load %arg10[%c0_12, %c0_13] : memref<1x32xf32, #tpu.memory_space<vmem>>, vector<1x32xf32>
    %cst_14 = arith.constant dense<0.000000e+00> : vector<1x8xf32>
    %20 = tpu.matmul %19, %18, %cst_14 {dimension_numbers = #tpu.dot_dimension_numbers<[1], [1], [0], [0], [0, 0, 1, 0], [], []>} : vector<1x32xf32>, vector<8x32xf32>, vector<1x8xf32> -> vector<1x8xf32>
    %c0_15 = arith.constant 0 : index
    %c0_16 = arith.constant 0 : index
    %21 = vector.load %arg12[%c0_15, %c0_16] : memref<1x1xf32, #tpu.memory_space<vmem>>, vector<1x1xf32>
    %22 = vector.broadcast %21 : vector<1x1xf32> to vector<1x8xf32>
    %23 = arith.addf %20, %22 : vector<1x8xf32>
    %c0_17 = arith.constant 0 : index
    %c0_18 = arith.constant 0 : index
    %24 = vector.load %arg6[%c0_17, %c0_18] : memref<32x64xf32, #tpu.memory_space<vmem>>, vector<32x64xf32>
    %cst_19 = arith.constant dense<0.000000e+00> : vector<8x64xf32>
    %25 = tpu.matmul %0, %24, %cst_19 {dimension_numbers = #tpu.dot_dimension_numbers<[1], [0], [0], [1], [0, 0, 1, 1], [], []>} : vector<8x32xf32>, vector<32x64xf32>, vector<8x64xf32> -> vector<8x64xf32>
    %c0_20 = arith.constant 0 : index
    %c0_21 = arith.constant 0 : index
    %26 = vector.load %arg7[%c0_20, %c0_21] : memref<1x64xf32, #tpu.memory_space<vmem>>, vector<1x64xf32>
    %27 = vector.broadcast %26 : vector<1x64xf32> to vector<8x64xf32>
    %28 = arith.addf %25, %27 : vector<8x64xf32>
    %cst_22 = arith.constant 0.000000e+00 : f32
    %29 = vector.broadcast %cst_22 : f32 to vector<8x64xf32>
    %30 = arith.maximumf %28, %29 : vector<8x64xf32>
    %c0_23 = arith.constant 0 : index
    %c0_24 = arith.constant 0 : index
    %31 = vector.load %arg8[%c0_23, %c0_24] : memref<64x32xf32, #tpu.memory_space<vmem>>, vector<64x32xf32>
    %cst_25 = arith.constant dense<0.000000e+00> : vector<8x32xf32>
    %32 = tpu.matmul %30, %31, %cst_25 {dimension_numbers = #tpu.dot_dimension_numbers<[1], [0], [0], [1], [0, 0, 1, 1], [], []>} : vector<8x64xf32>, vector<64x32xf32>, vector<8x32xf32> -> vector<8x32xf32>
    %c0_26 = arith.constant 0 : index
    %c0_27 = arith.constant 0 : index
    %33 = vector.load %arg9[%c0_26, %c0_27] : memref<1x32xf32, #tpu.memory_space<vmem>>, vector<1x32xf32>
    %34 = vector.broadcast %33 : vector<1x32xf32> to vector<8x32xf32>
    %35 = arith.addf %32, %34 : vector<8x32xf32>
    %cst_28 = arith.constant 0.000000e+00 : f32
    %36 = vector.broadcast %cst_28 : f32 to vector<8x32xf32>
    %37 = arith.maximumf %35, %36 : vector<8x32xf32>
    %c0_29 = arith.constant 0 : index
    %c0_30 = arith.constant 0 : index
    %38 = vector.load %arg11[%c0_29, %c0_30] : memref<1x32xf32, #tpu.memory_space<vmem>>, vector<1x32xf32>
    %cst_31 = arith.constant dense<0.000000e+00> : vector<1x8xf32>
    %39 = tpu.matmul %38, %37, %cst_31 {dimension_numbers = #tpu.dot_dimension_numbers<[1], [1], [0], [0], [0, 0, 1, 0], [], []>} : vector<1x32xf32>, vector<8x32xf32>, vector<1x8xf32> -> vector<1x8xf32>
    %40 = arith.addf %23, %39 : vector<1x8xf32>
    %41 = arith.negf %40 : vector<1x8xf32>
    %42 = math.exp %41 : vector<1x8xf32>
    %cst_32 = arith.constant 1.000000e+00 : f32
    %43 = vector.broadcast %cst_32 : f32 to vector<1x8xf32>
    %44 = arith.addf %43, %42 : vector<1x8xf32>
    %45 = arith.divf %43, %44 : vector<1x8xf32>
    %c0_33 = arith.constant 0 : index
    %c0_34 = arith.constant 0 : index
    %46 = vector.load %arg13[%c0_33, %c0_34] : memref<1x8xf32, #tpu.memory_space<vmem>>, vector<1x8xf32>
    tpu.vector_store %arg13[%c0_33, %c0_34], %45 {strides = array<i32>} : memref<1x8xf32, #tpu.memory_space<vmem>>, vector<1x8xf32>,
    return
  }
  func.func @transform_0(%arg0: i32) -> (i32, i32) {
    %c0_i32 = arith.constant 0 : i32
    %c0_i32_0 = arith.constant 0 : i32
    return %arg0, %c0_i32 : i32, i32
  }
  func.func @transform_1(%arg0: i32) -> (i32, i32) {
    %c0_i32 = arith.constant 0 : i32
    %c0_i32_0 = arith.constant 0 : i32
    %c0_i32_1 = arith.constant 0 : i32
    return %c0_i32, %c0_i32_0 : i32, i32
  }
  func.func @transform_2(%arg0: i32) -> (i32, i32) {
    %c0_i32 = arith.constant 0 : i32
    %c0_i32_0 = arith.constant 0 : i32
    %c0_i32_1 = arith.constant 0 : i32
    return %c0_i32, %c0_i32_0 : i32, i32
  }
  func.func @transform_3(%arg0: i32) -> (i32, i32) {
    %c0_i32 = arith.constant 0 : i32
    %c0_i32_0 = arith.constant 0 : i32
    %c0_i32_1 = arith.constant 0 : i32
    return %c0_i32, %c0_i32_0 : i32, i32
  }
  func.func @transform_4(%arg0: i32) -> (i32, i32) {
    %c0_i32 = arith.constant 0 : i32
    %c0_i32_0 = arith.constant 0 : i32
    %c0_i32_1 = arith.constant 0 : i32
    return %c0_i32, %c0_i32_0 : i32, i32
  }
  func.func @transform_5(%arg0: i32) -> (i32, i32) {
    %c0_i32 = arith.constant 0 : i32
    %c0_i32_0 = arith.constant 0 : i32
    %c0_i32_1 = arith.constant 0 : i32
    return %c0_i32, %c0_i32_0 : i32, i32
  }
  func.func @transform_6(%arg0: i32) -> (i32, i32) {
    %c0_i32 = arith.constant 0 : i32
    %c0_i32_0 = arith.constant 0 : i32
    %c0_i32_1 = arith.constant 0 : i32
    return %c0_i32, %c0_i32_0 : i32, i32
  }
  func.func @transform_7(%arg0: i32) -> (i32, i32) {
    %c0_i32 = arith.constant 0 : i32
    %c0_i32_0 = arith.constant 0 : i32
    %c0_i32_1 = arith.constant 0 : i32
    return %c0_i32, %c0_i32_0 : i32, i32
  }
  func.func @transform_8(%arg0: i32) -> (i32, i32) {
    %c0_i32 = arith.constant 0 : i32
    %c0_i32_0 = arith.constant 0 : i32
    %c0_i32_1 = arith.constant 0 : i32
    return %c0_i32, %c0_i32_0 : i32, i32
  }
  func.func @transform_9(%arg0: i32) -> (i32, i32) {
    %c0_i32 = arith.constant 0 : i32
    %c0_i32_0 = arith.constant 0 : i32
    %c0_i32_1 = arith.constant 0 : i32
    return %c0_i32, %c0_i32_0 : i32, i32
  }
  func.func @transform_10(%arg0: i32) -> (i32, i32) {
    %c0_i32 = arith.constant 0 : i32
    %c0_i32_0 = arith.constant 0 : i32
    %c0_i32_1 = arith.constant 0 : i32
    return %c0_i32, %c0_i32_0 : i32, i32
  }
  func.func @transform_11(%arg0: i32) -> (i32, i32) {
    %c0_i32 = arith.constant 0 : i32
    %c0_i32_0 = arith.constant 0 : i32
    %c0_i32_1 = arith.constant 0 : i32
    return %c0_i32, %c0_i32_0 : i32, i32
  }
  func.func @transform_12(%arg0: i32) -> (i32, i32) {
    %c0_i32 = arith.constant 0 : i32
    %c0_i32_0 = arith.constant 0 : i32
    return %c0_i32, %arg0 : i32, i32
  }
}

module attributes {stable_mosaic.version = 11 : i64} {
  func.func @_dcnv2_kernel(%arg0: i32, %arg1: memref<8x32xf32, #tpu.memory_space<vmem>>, %arg2: memref<32x32xf32, #tpu.memory_space<vmem>>, %arg3: memref<1x32xf32, #tpu.memory_space<vmem>>, %arg4: memref<32x32xf32, #tpu.memory_space<vmem>>, %arg5: memref<1x32xf32, #tpu.memory_space<vmem>>, %arg6: memref<32x64xf32, #tpu.memory_space<vmem>>, %arg7: memref<1x64xf32, #tpu.memory_space<vmem>>, %arg8: memref<64x32xf32, #tpu.memory_space<vmem>>, %arg9: memref<1x32xf32, #tpu.memory_space<vmem>>, %arg10: memref<1x32xf32, #tpu.memory_space<vmem>>, %arg11: memref<1x32xf32, #tpu.memory_space<vmem>>, %arg12: memref<1x1xf32, #tpu.memory_space<vmem>>, %arg13: memref<1x8xf32, #tpu.memory_space<vmem>>) attributes {dimension_semantics = [#tpu.dimension_semantics<parallel>], iteration_bounds = array<i64: 1>, scalar_prefetch = 0 : i64, scratch_operands = 0 : i64, tpu.core_type = #tpu.core_type<tc>, window_params = [{transform_indices = @transform_0, window_bounds = array<i64: 8, 32>}, {pipeline_mode = #tpu.pipeline_mode<synchronous>, transform_indices = @transform_1, window_bounds = array<i64: 32, 32>}, {pipeline_mode = #tpu.pipeline_mode<synchronous>, transform_indices = @transform_2, window_bounds = array<i64: 1, 32>}, {pipeline_mode = #tpu.pipeline_mode<synchronous>, transform_indices = @transform_3, window_bounds = array<i64: 32, 32>}, {pipeline_mode = #tpu.pipeline_mode<synchronous>, transform_indices = @transform_4, window_bounds = array<i64: 1, 32>}, {pipeline_mode = #tpu.pipeline_mode<synchronous>, transform_indices = @transform_5, window_bounds = array<i64: 32, 64>}, {pipeline_mode = #tpu.pipeline_mode<synchronous>, transform_indices = @transform_6, window_bounds = array<i64: 1, 64>}, {pipeline_mode = #tpu.pipeline_mode<synchronous>, transform_indices = @transform_7, window_bounds = array<i64: 64, 32>}, {pipeline_mode = #tpu.pipeline_mode<synchronous>, transform_indices = @transform_8, window_bounds = array<i64: 1, 32>}, {pipeline_mode = #tpu.pipeline_mode<synchronous>, transform_indices = @transform_9, window_bounds = array<i64: 1, 32>}, {pipeline_mode = #tpu.pipeline_mode<synchronous>, transform_indices = @transform_10, window_bounds = array<i64: 1, 32>}, {pipeline_mode = #tpu.pipeline_mode<synchronous>, transform_indices = @transform_11, window_bounds = array<i64: 1, 1>}, {transform_indices = @transform_12, window_bounds = array<i64: 1, 8>}]} {
    %c0 = arith.constant 0 : index
    %c0_0 = arith.constant 0 : index
    %0 = vector.load %arg1[%c0, %c0_0] : memref<8x32xf32, #tpu.memory_space<vmem>>, vector<8x32xf32>
    %c0_1 = arith.constant 0 : index
    %c0_2 = arith.constant 0 : index
    %1 = vector.load %arg2[%c0_1, %c0_2] : memref<32x32xf32, #tpu.memory_space<vmem>>, vector<32x32xf32>
    %cst = arith.constant dense<0.000000e+00> : vector<8x32xf32>
    %2 = tpu.matmul %0, %1, %cst {dimension_numbers = #tpu.dot_dimension_numbers<[1], [0], [0], [1], [0, 0, 1, 1], [], []>} : vector<8x32xf32>, vector<32x32xf32>, vector<8x32xf32> -> vector<8x32xf32>
    %c0_3 = arith.constant 0 : index
    %c0_4 = arith.constant 0 : index
    %3 = vector.load %arg3[%c0_3, %c0_4] : memref<1x32xf32, #tpu.memory_space<vmem>>, vector<1x32xf32>
    %4 = vector.broadcast %3 : vector<1x32xf32> to vector<8x32xf32>
    %5 = arith.addf %2, %4 : vector<8x32xf32>
    %cst_5 = arith.constant 0.000000e+00 : f32
    %6 = vector.broadcast %cst_5 : f32 to vector<8x32xf32>
    %7 = arith.maximumf %5, %6 : vector<8x32xf32>
    %8 = arith.mulf %0, %7 : vector<8x32xf32>
    %9 = arith.addf %8, %0 : vector<8x32xf32>
    %c0_6 = arith.constant 0 : index
    %c0_7 = arith.constant 0 : index
    %10 = vector.load %arg4[%c0_6, %c0_7] : memref<32x32xf32, #tpu.memory_space<vmem>>, vector<32x32xf32>
    %cst_8 = arith.constant dense<0.000000e+00> : vector<8x32xf32>
    %11 = tpu.matmul %9, %10, %cst_8 {dimension_numbers = #tpu.dot_dimension_numbers<[1], [0], [0], [1], [0, 0, 1, 1], [], []>} : vector<8x32xf32>, vector<32x32xf32>, vector<8x32xf32> -> vector<8x32xf32>
    %c0_9 = arith.constant 0 : index
    %c0_10 = arith.constant 0 : index
    %12 = vector.load %arg5[%c0_9, %c0_10] : memref<1x32xf32, #tpu.memory_space<vmem>>, vector<1x32xf32>
    %13 = vector.broadcast %12 : vector<1x32xf32> to vector<8x32xf32>
    %14 = arith.addf %11, %13 : vector<8x32xf32>
    %cst_11 = arith.constant 0.000000e+00 : f32
    %15 = vector.broadcast %cst_11 : f32 to vector<8x32xf32>
    %16 = arith.maximumf %14, %15 : vector<8x32xf32>
    %17 = arith.mulf %0, %16 : vector<8x32xf32>
    %18 = arith.addf %17, %9 : vector<8x32xf32>
    %c0_12 = arith.constant 0 : index
    %c0_13 = arith.constant 0 : index
    %19 = vector.load %arg10[%c0_12, %c0_13] : memref<1x32xf32, #tpu.memory_space<vmem>>, vector<1x32xf32>
    %cst_14 = arith.constant dense<0.000000e+00> : vector<1x8xf32>
    %20 = tpu.matmul %19, %18, %cst_14 {dimension_numbers = #tpu.dot_dimension_numbers<[1], [1], [0], [0], [0, 0, 1, 0], [], []>} : vector<1x32xf32>, vector<8x32xf32>, vector<1x8xf32> -> vector<1x8xf32>
    %c0_15 = arith.constant 0 : index
    %c0_16 = arith.constant 0 : index
    %21 = vector.load %arg12[%c0_15, %c0_16] : memref<1x1xf32, #tpu.memory_space<vmem>>, vector<1x1xf32>
    %22 = vector.broadcast %21 : vector<1x1xf32> to vector<1x8xf32>
    %23 = arith.addf %20, %22 : vector<1x8xf32>
    %c0_17 = arith.constant 0 : index
    %c0_18 = arith.constant 0 : index
    %24 = vector.load %arg6[%c0_17, %c0_18] : memref<32x64xf32, #tpu.memory_space<vmem>>, vector<32x64xf32>
    %cst_19 = arith.constant dense<0.000000e+00> : vector<8x64xf32>
    %25 = tpu.matmul %0, %24, %cst_19 {dimension_numbers = #tpu.dot_dimension_numbers<[1], [0], [0], [1], [0, 0, 1, 1], [], []>} : vector<8x32xf32>, vector<32x64xf32>, vector<8x64xf32> -> vector<8x64xf32>
    %c0_20 = arith.constant 0 : index
    %c0_21 = arith.constant 0 : index
    %26 = vector.load %arg7[%c0_20, %c0_21] : memref<1x64xf32, #tpu.memory_space<vmem>>, vector<1x64xf32>
    %27 = vector.broadcast %26 : vector<1x64xf32> to vector<8x64xf32>
    %28 = arith.addf %25, %27 : vector<8x64xf32>
    %cst_22 = arith.constant 0.000000e+00 : f32
    %29 = vector.broadcast %cst_22 : f32 to vector<8x64xf32>
    %30 = arith.maximumf %28, %29 : vector<8x64xf32>
    %c0_23 = arith.constant 0 : index
    %c0_24 = arith.constant 0 : index
    %31 = vector.load %arg8[%c0_23, %c0_24] : memref<64x32xf32, #tpu.memory_space<vmem>>, vector<64x32xf32>
    %cst_25 = arith.constant dense<0.000000e+00> : vector<8x32xf32>
    %32 = tpu.matmul %30, %31, %cst_25 {dimension_numbers = #tpu.dot_dimension_numbers<[1], [0], [0], [1], [0, 0, 1, 1], [], []>} : vector<8x64xf32>, vector<64x32xf32>, vector<8x32xf32> -> vector<8x32xf32>
    %c0_26 = arith.constant 0 : index
    %c0_27 = arith.constant 0 : index
    %33 = vector.load %arg9[%c0_26, %c0_27] : memref<1x32xf32, #tpu.memory_space<vmem>>, vector<1x32xf32>
    %34 = vector.broadcast %33 : vector<1x32xf32> to vector<8x32xf32>
    %35 = arith.addf %32, %34 : vector<8x32xf32>
    %cst_28 = arith.constant 0.000000e+00 : f32
    %36 = vector.broadcast %cst_28 : f32 to vector<8x32xf32>
    %37 = arith.maximumf %35, %36 : vector<8x32xf32>
    %c0_29 = arith.constant 0 : index
    %c0_30 = arith.constant 0 : index
    %38 = vector.load %arg11[%c0_29, %c0_30] : memref<1x32xf32, #tpu.memory_space<vmem>>, vector<1x32xf32>
    %cst_31 = arith.constant dense<0.000000e+00> : vector<1x8xf32>
    %39 = tpu.matmul %38, %37, %cst_31 {dimension_numbers = #tpu.dot_dimension_numbers<[1], [1], [0], [0], [0, 0, 1, 0], [], []>} : vector<1x32xf32>, vector<8x32xf32>, vector<1x8xf32> -> vector<1x8xf32>
    %40 = arith.addf %23, %39 : vector<1x8xf32>
    %41 = arith.negf %40 : vector<1x8xf32>
    %42 = math.exp %41 : vector<1x8xf32>
    %cst_32 = arith.constant 1.000000e+00 : f32
    %43 = vector.broadcast %cst_32 : f32 to vector<1x8xf32>
    %44 = arith.addf %43, %42 : vector<1x8xf32>
    %45 = arith.divf %43, %44 : vector<1x8xf32>
    %c0_33 = arith.constant 0 : index
    %c0_34 = arith.constant 0 : index
    %46 = vector.load %arg13[%c0_33, %c0_34] : memref<1x8xf32, #tpu.memory_space<vmem>>, vector<1x8xf32>
    tpu.vector_store %arg13[%c0_33, %c0_34], %45 {strides = array<i32>} : memref<1x8xf32, #tpu.memory_space<vmem>>, vector<1x8xf32>,
    return
  }
  func.func @transform_0(%arg0: i32) -> (i32, i32) {
    %c0_i32 = arith.constant 0 : i32
    %c0_i32_0 = arith.constant 0 : i32
    return %arg0, %c0_i32 : i32, i32
  }
  func.func @transform_1(%arg0: i32) -> (i32, i32) {
    %c0_i32 = arith.constant 0 : i32
    %c0_i32_0 = arith.constant 0 : i32
    %c0_i32_1 = arith.constant 0 : i32
    return %c0_i32, %c0_i32_0 : i32, i32
  }
  func.func @transform_2(%arg0: i32) -> (i32, i32) {
    %c0_i32 = arith.constant 0 : i32
    %c0_i32_0 = arith.constant 0 : i32
    %c0_i32_1 = arith.constant 0 : i32
    return %c0_i32, %c0_i32_0 : i32, i32
  }
  func.func @transform_3(%arg0: i32) -> (i32, i32) {
    %c0_i32 = arith.constant 0 : i32
    %c0_i32_0 = arith.constant 0 : i32
    %c0_i32_1 = arith.constant 0 : i32
    return %c0_i32, %c0_i32_0 : i32, i32
  }
  func.func @transform_4(%arg0: i32) -> (i32, i32) {
    %c0_i32 = arith.constant 0 : i32
    %c0_i32_0 = arith.constant 0 : i32
    %c0_i32_1 = arith.constant 0 : i32
    return %c0_i32, %c0_i32_0 : i32, i32
  }
  func.func @transform_5(%arg0: i32) -> (i32, i32) {
    %c0_i32 = arith.constant 0 : i32
    %c0_i32_0 = arith.constant 0 : i32
    %c0_i32_1 = arith.constant 0 : i32
    return %c0_i32, %c0_i32_0 : i32, i32
  }
  func.func @transform_6(%arg0: i32) -> (i32, i32) {
    %c0_i32 = arith.constant 0 : i32
    %c0_i32_0 = arith.constant 0 : i32
    %c0_i32_1 = arith.constant 0 : i32
    return %c0_i32, %c0_i32_0 : i32, i32
  }
  func.func @transform_7(%arg0: i32) -> (i32, i32) {
    %c0_i32 = arith.constant 0 : i32
    %c0_i32_0 = arith.constant 0 : i32
    %c0_i32_1 = arith.constant 0 : i32
    return %c0_i32, %c0_i32_0 : i32, i32
  }
  func.func @transform_8(%arg0: i32) -> (i32, i32) {
    %c0_i32 = arith.constant 0 : i32
    %c0_i32_0 = arith.constant 0 : i32
    %c0_i32_1 = arith.constant 0 : i32
    return %c0_i32, %c0_i32_0 : i32, i32
  }
  func.func @transform_9(%arg0: i32) -> (i32, i32) {
    %c0_i32 = arith.constant 0 : i32
    %c0_i32_0 = arith.constant 0 : i32
    %c0_i32_1 = arith.constant 0 : i32
    return %c0_i32, %c0_i32_0 : i32, i32
  }
  func.func @transform_10(%arg0: i32) -> (i32, i32) {
    %c0_i32 = arith.constant 0 : i32
    %c0_i32_0 = arith.constant 0 : i32
    %c0_i32_1 = arith.constant 0 : i32
    return %c0_i32, %c0_i32_0 : i32, i32
  }
  func.func @transform_11(%arg0: i32) -> (i32, i32) {
    %c0_i32 = arith.constant 0 : i32
    %c0_i32_0 = arith.constant 0 : i32
    %c0_i32_1 = arith.constant 0 : i32
    return %c0_i32, %c0_i32_0 : i32, i32
  }
  func.func @transform_12(%arg0: i32) -> (i32, i32) {
    %c0_i32 = arith.constant 0 : i32
    %c0_i32_0 = arith.constant 0 : i32
    return %c0_i32, %arg0 : i32, i32
  }
}

</mosaic_0001>

<llo_original>
// kernel: tpu_custom_call.1
$region0: #{tpu_custom_call.1}
  #allocation0 [shape = 'u32[]', space=smem, size = 0x4, offset = 0x4, fixed_abs, tag = 'smem constant byte address 0x4 - core index']
  #allocation1 [shape = 'u32[144,128]{1,0:T(1,128)}', space=vmem, size = 0x12000, scoped, tag = 'internal scratch']
  #allocation2 [shape = 'f32[1,1]{1,0:T(1,128)S(1)}', space=vmem, size = 0x200, scoped, tag = 'scoped memory for tpu_custom_call.1']
  %s0 = inlined_call_operand.hbm [shape: f32[8,32], index: 0, kind: input, shape index: {}]
  %s1 = inlined_call_operand.vmem [shape: f32[32,32], index: 1, kind: input, shape index: {}]
  %s2 = inlined_call_operand.vmem [shape: f32[1,32], index: 2, kind: input, shape index: {}]
  %s3 = inlined_call_operand.vmem [shape: f32[32,32], index: 3, kind: input, shape index: {}]
  %s4 = inlined_call_operand.vmem [shape: f32[1,32], index: 4, kind: input, shape index: {}]
  %s5 = inlined_call_operand.vmem [shape: f32[32,64], index: 5, kind: input, shape index: {}]
  %s6 = inlined_call_operand.vmem [shape: f32[1,64], index: 6, kind: input, shape index: {}]
  %s7 = inlined_call_operand.vmem [shape: f32[64,32], index: 7, kind: input, shape index: {}]
  %s8 = inlined_call_operand.vmem [shape: f32[1,32], index: 8, kind: input, shape index: {}]
  %s9 = inlined_call_operand.vmem [shape: f32[1,32], index: 9, kind: input, shape index: {}]
  %s10 = inlined_call_operand.vmem [shape: f32[1,32], index: 10, kind: input, shape index: {}]
  %s11 = inlined_call_operand.<no memory space> [shape: f32[1,1], index: 11, kind: input, shape index: {}]
  %s12 = inlined_call_operand.hbm [shape: f32[1,8], index: 12, kind: output, shape index: {}]
  %s13 = sld [smem:[#allocation0]]
  $region62: #{tpu_custom_call.1} parent=0
    _
  %s15 = ssub.s32 1, %s13
  %s16 = scalar_select 0, %s15, %s13
  %v17 = vstv %s11
  %18 = vst [vmem:[#allocation2] sm:$0x1] %v17
  $region1: #{tpu_custom_call.1} parent=0
    #allocation3 [shape = 'u8[4096]{0}', space=vmem, size = 0x1000, scoped, tag = 'input window, operand 0, single buffered']
    #allocation4 [shape = 's32[1]{0}', space=sflag, size = 0x4, scoped, tag = 'scoped memory for tpu_custom_call.1']
    #allocation5 [shape = 's32[1]{0}', space=sflag, size = 0x4, scoped, tag = 'scoped memory for tpu_custom_call.1']
    #allocation6 [shape = 'u8[512]{0}', space=vmem, size = 0x400, scoped, tag = 'output window, operand 0, single buffered']
    %19 = vsyncpa [#allocation4], 0
    %20 = vsyncpa [#allocation5], 0
    // Predicated region
    $region2: #{tpu_custom_call.1} parent=1 // pred_check
      _
    $region3: #{tpu_custom_call.1} parent=1 // pred_check_branch
      %22 = sbr.rel (0) target = $region5
    $region4: #{tpu_custom_call.1} parent=1 // pred_region
      %s24 = ssub.s32 128, 128
      %25 = vsyncadd [#allocation4], %s24
      %s27 = sshll.u32 [#allocation3], 4
      %s28 = int_to_ptr.vmem [resolvable:$true] %s27
      %30 = dma.hbm_to_vmem [thread:$0]  %s0, 128, %s28, [#allocation4]
    $region5: #{tpu_custom_call.1} parent=1 // pred_fallthru
      _
    // Predicated region
    $region6: #{tpu_custom_call.1} parent=1 // pred_check
      _
    $region7: #{tpu_custom_call.1} parent=1 // pred_check_branch
      %32 = sbr.rel (0) target = $region9
    $region8: #{tpu_custom_call.1} parent=1 // pred_region
      _
    $region9: #{tpu_custom_call.1} parent=1 // pred_fallthru
      _
    // Predicated region
    $region10: #{tpu_custom_call.1} parent=1 // pred_check
      _
    $region11: #{tpu_custom_call.1} parent=1 // pred_check_branch
      %34 = sbr.rel (0) target = $region13
    $region12: #{tpu_custom_call.1} parent=1 // pred_region
      _
    $region13: #{tpu_custom_call.1} parent=1 // pred_fallthru
      _
    // Predicated region
    $region14: #{tpu_custom_call.1} parent=1 // pred_check
      _
    $region15: #{tpu_custom_call.1} parent=1 // pred_check_branch
      %36 = sbr.rel (0) target = $region17
    $region16: #{tpu_custom_call.1} parent=1 // pred_region
      _
    $region17: #{tpu_custom_call.1} parent=1 // pred_fallthru
      _
    // Predicated region
    $region18: #{tpu_custom_call.1} parent=1 // pred_check
      _
    $region19: #{tpu_custom_call.1} parent=1 // pred_check_branch
      %38 = sbr.rel (0) target = $region21
    $region20: #{tpu_custom_call.1} parent=1 // pred_region
      _
    $region21: #{tpu_custom_call.1} parent=1 // pred_fallthru
      _
    // Predicated region
    $region22: #{tpu_custom_call.1} parent=1 // pred_check
      _
    $region23: #{tpu_custom_call.1} parent=1 // pred_check_branch
      %40 = sbr.rel (0) target = $region25
    $region24: #{tpu_custom_call.1} parent=1 // pred_region
      _
    $region25: #{tpu_custom_call.1} parent=1 // pred_fallthru
      _
    // Predicated region
    $region26: #{tpu_custom_call.1} parent=1 // pred_check
      _
    $region27: #{tpu_custom_call.1} parent=1 // pred_check_branch
      %42 = sbr.rel (0) target = $region29
    $region28: #{tpu_custom_call.1} parent=1 // pred_region
      _
    $region29: #{tpu_custom_call.1} parent=1 // pred_fallthru
      _
    // Predicated region
    $region30: #{tpu_custom_call.1} parent=1 // pred_check
      _
    $region31: #{tpu_custom_call.1} parent=1 // pred_check_branch
      %44 = sbr.rel (0) target = $region33
    $region32: #{tpu_custom_call.1} parent=1 // pred_region
      _
    $region33: #{tpu_custom_call.1} parent=1 // pred_fallthru
      _
    // Predicated region
    $region34: #{tpu_custom_call.1} parent=1 // pred_check
      _
    $region35: #{tpu_custom_call.1} parent=1 // pred_check_branch
      %46 = sbr.rel (0) target = $region37
    $region36: #{tpu_custom_call.1} parent=1 // pred_region
      _
    $region37: #{tpu_custom_call.1} parent=1 // pred_fallthru
      _
    // Predicated region
    $region38: #{tpu_custom_call.1} parent=1 // pred_check
      _
    $region39: #{tpu_custom_call.1} parent=1 // pred_check_branch
      %48 = sbr.rel (0) target = $region41
    $region40: #{tpu_custom_call.1} parent=1 // pred_region
      _
    $region41: #{tpu_custom_call.1} parent=1 // pred_fallthru
      _
    // Predicated region
    $region42: #{tpu_custom_call.1} parent=1 // pred_check
      _
    $region43: #{tpu_custom_call.1} parent=1 // pred_check_branch
      %50 = sbr.rel (0) target = $region45
    $region44: #{tpu_custom_call.1} parent=1 // pred_region
      _
    $region45: #{tpu_custom_call.1} parent=1 // pred_fallthru
      _
    // Predicated region
    $region46: #{tpu_custom_call.1} parent=1 // pred_check
      _
    $region47: #{tpu_custom_call.1} parent=1 // pred_check_branch
      %52 = sbr.rel (0) target = $region49
    $region48: #{tpu_custom_call.1} parent=1 // pred_region
      _
    $region49: #{tpu_custom_call.1} parent=1 // pred_fallthru
      _
    // Predicated region
    $region50: #{tpu_custom_call.1} parent=1 // pred_check
      _
    $region51: #{tpu_custom_call.1} parent=1 // pred_check_branch
      %54 = sbr.rel (0) target = $region53
    $region52: #{tpu_custom_call.1} parent=1 // pred_region
      %55 = dma.done [#allocation4], 128
    $region53: #{tpu_custom_call.1} parent=1 // pred_fallthru
      _
    %v56 = vld [vmem:[#allocation3] sm:$0xff]
    %v57 = vld [vmem:[%s1] sm:$0xff]
    %v58 = vld [vmem:[%s1 + $0x8] sm:$0xff]
    %v59 = vld [vmem:[%s1 + $0x10] sm:$0xff]
    %v60 = vld [vmem:[%s1 + $0x18] sm:$0xff]
    %v61 = vld [vmem:[%s2] sm:$0x1]
    %v63 = vlaneseq
    %v64 = vshrl.u32 %v63, 7
    %v65 = vsub.s32 0, %v64
    %v66 = vrot.slane %v61, %v65
    %vm68 = vcmask 261120
    %v70 = vsel %vm68, %v56, 0
    %72 = vmatprep.subr.mxu0 0.0
    %73 = vmatpush1.msra.mxu0 0.0
    %74 = vmatprep.subr.mxu0 0.0
    %75 = vmatpush1.msra.mxu0 0.0
    %76 = vmatprep.subr.mxu0 0.0
    %77 = vmatpush1.msra.mxu0 0.0
    %78 = vmatprep.subr.mxu0 0.0
    %79 = vmatpush1.msra.mxu0 0.0
    %80 = vmatprep.subr.mxu0 0.0
    %81 = vmatpush1.msra.mxu0 0.0
    %82 = vmatprep.subr.mxu0 0.0
    %83 = vmatpush1.msra.mxu0 0.0
    %84 = vmatprep.subr.mxu0 0.0
    %85 = vmatpush1.msra.mxu0 0.0
    %86 = vmatprep.subr.mxu0 0.0
    %87 = vmatpush1.msra.mxu0 0.0
    %88 = vmatprep.subr.mxu0 0.0
    %89 = vmatpush1.msra.mxu0 0.0
    %90 = vmatprep.subr.mxu0 0.0
    %91 = vmatpush1.msra.mxu0 0.0
    %92 = vmatprep.subr.mxu0 0.0
    %93 = vmatpush1.msra.mxu0 0.0
    %94 = vmatprep.subr.mxu0 0.0
    %95 = vmatpush1.msra.mxu0 0.0
    %96 = vmatprep.subr.mxu0 0.0
    %97 = vmatpush1.msra.mxu0 %v60
    %98 = vmatprep.subr.mxu0 0.0
    %99 = vmatpush1.msra.mxu0 %v59
    %100 = vmatprep.subr.mxu0 0.0
    %101 = vmatpush1.msra.mxu0 %v58
    %102 = vmatprep.subr.mxu0 0.0
    %103 = vmatpush1.msra.mxu0 %v57
    %104 = vmatprep.subr.mxu0 0.0
    %105 = vmatpush2.msra.mxu0 0.0
    %106 = vmatprep.subr.mxu0 0.0
    %107 = vmatpush2.msra.mxu0 0.0
    %108 = vmatprep.subr.mxu0 0.0
    %109 = vmatpush2.msra.mxu0 0.0
    %110 = vmatprep.subr.mxu0 0.0
    %111 = vmatpush2.msra.mxu0 0.0
    %112 = vmatprep.subr.mxu0 0.0
    %113 = vmatpush2.msra.mxu0 0.0
    %114 = vmatprep.subr.mxu0 0.0
    %115 = vmatpush2.msra.mxu0 0.0
    %116 = vmatprep.subr.mxu0 0.0
    %117 = vmatpush2.msra.mxu0 0.0
    %118 = vmatprep.subr.mxu0 0.0
    %119 = vmatpush2.msra.mxu0 0.0
    %120 = vmatprep.subr.mxu0 0.0
    %121 = vmatpush2.msra.mxu0 0.0
    %122 = vmatprep.subr.mxu0 0.0
    %123 = vmatpush2.msra.mxu0 0.0
    %124 = vmatprep.subr.mxu0 0.0
    %125 = vmatpush2.msra.mxu0 0.0
    %126 = vmatprep.subr.mxu0 0.0
    %127 = vmatpush2.msra.mxu0 0.0
    %128 = vmatprep.subr.mxu0 0.0
    %129 = vmatpush2.msra.mxu0 0.0
    %130 = vmatprep.subr.mxu0 0.0
    %131 = vmatpush2.msra.mxu0 0.0
    %132 = vmatprep.subr.mxu0 0.0
    %133 = vmatpush2.msra.mxu0 0.0
    %134 = vmatprep.subr.mxu0 0.0
    %135 = vmatpush2.msra.mxu0 0.0
    %136 = vmatprep.mubr.f32.mxu0 0.0
    %137 = vmatmul.mubr.f32.gmra.mxu0 %v70
    %v138 = vpop.f32.mrf.mxu0
    %v139 = vadd.f32 %v66, %v138
    %v140 = vpop.f32.mrf.mxu0
    %141 = vdwg.mxu0
    %v142 = vmax.f32 %v139, 0.0
    %v143 = vmul.f32 %v56, %v142
    %v144 = vadd.f32 %v143, %v56
    %v145 = vld [vmem:[%s3] sm:$0xff]
    %v146 = vld [vmem:[%s3 + $0x8] sm:$0xff]
    %v147 = vld [vmem:[%s3 + $0x10] sm:$0xff]
    %v148 = vld [vmem:[%s3 + $0x18] sm:$0xff]
    %v149 = vld [vmem:[%s4] sm:$0x1]
    %v151 = vlaneseq
    %v152 = vshrl.u32 %v151, 7
    %v153 = vsub.s32 0, %v152
    %v154 = vrot.slane %v149, %v153
    %v157 = vsel %vm68, %v144, 0
    %159 = vmatprep.subr.mxu0 0.0
    %160 = vmatpush1.msra.mxu0 0.0
    %161 = vmatprep.subr.mxu0 0.0
    %162 = vmatpush1.msra.mxu0 0.0
    %163 = vmatprep.subr.mxu0 0.0
    %164 = vmatpush1.msra.mxu0 0.0
    %165 = vmatprep.subr.mxu0 0.0
    %166 = vmatpush1.msra.mxu0 0.0
    %167 = vmatprep.subr.mxu0 0.0
    %168 = vmatpush1.msra.mxu0 0.0
    %169 = vmatprep.subr.mxu0 0.0
    %170 = vmatpush1.msra.mxu0 0.0
    %171 = vmatprep.subr.mxu0 0.0
    %172 = vmatpush1.msra.mxu0 0.0
    %173 = vmatprep.subr.mxu0 0.0
    %174 = vmatpush1.msra.mxu0 0.0
    %175 = vmatprep.subr.mxu0 0.0
    %176 = vmatpush1.msra.mxu0 0.0
    %177 = vmatprep.subr.mxu0 0.0
    %178 = vmatpush1.msra.mxu0 0.0
    %179 = vmatprep.subr.mxu0 0.0
    %180 = vmatpush1.msra.mxu0 0.0
    %181 = vmatprep.subr.mxu0 0.0
    %182 = vmatpush1.msra.mxu0 0.0
    %183 = vmatprep.subr.mxu0 0.0
    %184 = vmatpush1.msra.mxu0 %v148
    %185 = vmatprep.subr.mxu0 0.0
    %186 = vmatpush1.msra.mxu0 %v147
    %187 = vmatprep.subr.mxu0 0.0
    %188 = vmatpush1.msra.mxu0 %v146
    %189 = vmatprep.subr.mxu0 0.0
    %190 = vmatpush1.msra.mxu0 %v145
    %191 = vmatprep.subr.mxu0 0.0
    %192 = vmatpush2.msra.mxu0 0.0
    %193 = vmatprep.subr.mxu0 0.0
    %194 = vmatpush2.msra.mxu0 0.0
    %195 = vmatprep.subr.mxu0 0.0
    %196 = vmatpush2.msra.mxu0 0.0
    %197 = vmatprep.subr.mxu0 0.0
    %198 = vmatpush2.msra.mxu0 0.0
    %199 = vmatprep.subr.mxu0 0.0
    %200 = vmatpush2.msra.mxu0 0.0
    %201 = vmatprep.subr.mxu0 0.0
    %202 = vmatpush2.msra.mxu0 0.0
    %203 = vmatprep.subr.mxu0 0.0
    %204 = vmatpush2.msra.mxu0 0.0
    %205 = vmatprep.subr.mxu0 0.0
    %206 = vmatpush2.msra.mxu0 0.0
    %207 = vmatprep.subr.mxu0 0.0
    %208 = vmatpush2.msra.mxu0 0.0
    %209 = vmatprep.subr.mxu0 0.0
    %210 = vmatpush2.msra.mxu0 0.0
    %211 = vmatprep.subr.mxu0 0.0
    %212 = vmatpush2.msra.mxu0 0.0
    %213 = vmatprep.subr.mxu0 0.0
    %214 = vmatpush2.msra.mxu0 0.0
    %215 = vmatprep.subr.mxu0 0.0
    %216 = vmatpush2.msra.mxu0 0.0
    %217 = vmatprep.subr.mxu0 0.0
    %218 = vmatpush2.msra.mxu0 0.0
    %219 = vmatprep.subr.mxu0 0.0
    %220 = vmatpush2.msra.mxu0 0.0
    %221 = vmatprep.subr.mxu0 0.0
    %222 = vmatpush2.msra.mxu0 0.0
    %223 = vmatprep.mubr.f32.mxu0 0.0
    %224 = vmatmul.mubr.f32.gmra.mxu0 %v157
    %v225 = vpop.f32.mrf.mxu0
    %v226 = vadd.f32 %v154, %v225
    %v227 = vpop.f32.mrf.mxu0
    %228 = vdwg.mxu0
    %v229 = vmax.f32 %v226, 0.0
    %v230 = vmul.f32 %v56, %v229
    %v231 = vadd.f32 %v230, %v144
    %v232 = vld [vmem:[%s9] sm:$0x1]
    %v233 = vld [vmem:[#allocation2] sm:$0x1]
    %235 = vset.pattern.permute.xlu0 0
    %236 = vperm.xlu0 %235, %v233
    %v237 = vpop.permute.xlu0 %236
    %v239 = vlaneseq
    %v240 = vshrl.u32 %v239, 7
    %v241 = vsub.s32 0, %v240
    %v242 = vrot.slane %v237, %v241
    %v244 = vsel %vm68, %v232, 0
    %v247 = vsel %vm68, %v231, 0
    %249 = vmatprep.subr.mxu0 0.0
    %250 = vmatpush1.xpose.msra.mxu0 0.0
    %251 = vmatprep.subr.mxu0 0.0
    %252 = vmatpush1.xpose.msra.mxu0 0.0
    %253 = vmatprep.subr.mxu0 0.0
    %254 = vmatpush1.xpose.msra.mxu0 0.0
    %255 = vmatprep.subr.mxu0 0.0
    %256 = vmatpush1.xpose.msra.mxu0 0.0
    %257 = vmatprep.subr.mxu0 0.0
    %258 = vmatpush1.xpose.msra.mxu0 0.0
    %259 = vmatprep.subr.mxu0 0.0
    %260 = vmatpush1.xpose.msra.mxu0 0.0
    %261 = vmatprep.subr.mxu0 0.0
    %262 = vmatpush1.xpose.msra.mxu0 0.0
    %263 = vmatprep.subr.mxu0 0.0
    %264 = vmatpush1.xpose.msra.mxu0 0.0
    %265 = vmatprep.subr.mxu0 0.0
    %266 = vmatpush1.xpose.msra.mxu0 0.0
    %267 = vmatprep.subr.mxu0 0.0
    %268 = vmatpush1.xpose.msra.mxu0 0.0
    %269 = vmatprep.subr.mxu0 0.0
    %270 = vmatpush1.xpose.msra.mxu0 0.0
    %271 = vmatprep.subr.mxu0 0.0
    %272 = vmatpush1.xpose.msra.mxu0 0.0
    %273 = vmatprep.subr.mxu0 0.0
    %274 = vmatpush1.xpose.msra.mxu0 0.0
    %275 = vmatprep.subr.mxu0 0.0
    %276 = vmatpush1.xpose.msra.mxu0 0.0
    %277 = vmatprep.subr.mxu0 0.0
    %278 = vmatpush1.xpose.msra.mxu0 0.0
    %279 = vmatprep.subr.mxu0 0.0
    %280 = vmatpush1.xpose.msra.mxu0 %v247
    %281 = vmatprep.subr.mxu0 0.0
    %282 = vmatpush2.xpose.msra.mxu0 0.0
    %283 = vmatprep.subr.mxu0 0.0
    %284 = vmatpush2.xpose.msra.mxu0 0.0
    %285 = vmatprep.subr.mxu0 0.0
    %286 = vmatpush2.xpose.msra.mxu0 0.0
    %287 = vmatprep.subr.mxu0 0.0
    %288 = vmatpush2.xpose.msra.mxu0 0.0
    %289 = vmatprep.subr.mxu0 0.0
    %290 = vmatpush2.xpose.msra.mxu0 0.0
    %291 = vmatprep.subr.mxu0 0.0
    %292 = vmatpush2.xpose.msra.mxu0 0.0
    %293 = vmatprep.subr.mxu0 0.0
    %294 = vmatpush2.xpose.msra.mxu0 0.0
    %295 = vmatprep.subr.mxu0 0.0
    %296 = vmatpush2.xpose.msra.mxu0 0.0
    %297 = vmatprep.subr.mxu0 0.0
    %298 = vmatpush2.xpose.msra.mxu0 0.0
    %299 = vmatprep.subr.mxu0 0.0
    %300 = vmatpush2.xpose.msra.mxu0 0.0
    %301 = vmatprep.subr.mxu0 0.0
    %302 = vmatpush2.xpose.msra.mxu0 0.0
    %303 = vmatprep.subr.mxu0 0.0
    %304 = vmatpush2.xpose.msra.mxu0 0.0
    %305 = vmatprep.subr.mxu0 0.0
    %306 = vmatpush2.xpose.msra.mxu0 0.0
    %307 = vmatprep.subr.mxu0 0.0
    %308 = vmatpush2.xpose.msra.mxu0 0.0
    %309 = vmatprep.subr.mxu0 0.0
    %310 = vmatpush2.xpose.msra.mxu0 0.0
    %311 = vmatprep.subr.mxu0 0.0
    %312 = vmatpush2.xpose.msra.mxu0 0.0
    %313 = vmatprep.mubr.f32.mxu0 0.0
    %314 = vmatmul.mubr.f32.gmra.mxu0 %v244
    %v315 = vpop.f32.mrf.mxu0
    %v316 = vadd.f32 %v242, %v315
    %v317 = vpop.f32.mrf.mxu0
    %318 = vdwg.mxu0
    %v319 = vld [vmem:[%s5] sm:$0xff]
    %v320 = vld [vmem:[%s5 + $0x8] sm:$0xff]
    %v321 = vld [vmem:[%s5 + $0x10] sm:$0xff]
    %v322 = vld [vmem:[%s5 + $0x18] sm:$0xff]
    %v323 = vld [vmem:[%s6] sm:$0x1]
    %v325 = vlaneseq
    %v326 = vshrl.u32 %v325, 7
    %v327 = vsub.s32 0, %v326
    %v328 = vrot.slane %v323, %v327
    %330 = vmatprep.subr.mxu0 0.0
    %331 = vmatpush1.msra.mxu0 0.0
    %332 = vmatprep.subr.mxu0 0.0
    %333 = vmatpush1.msra.mxu0 0.0
    %334 = vmatprep.subr.mxu0 0.0
    %335 = vmatpush1.msra.mxu0 0.0
    %336 = vmatprep.subr.mxu0 0.0
    %337 = vmatpush1.msra.mxu0 0.0
    %338 = vmatprep.subr.mxu0 0.0
    %339 = vmatpush1.msra.mxu0 0.0
    %340 = vmatprep.subr.mxu0 0.0
    %341 = vmatpush1.msra.mxu0 0.0
    %342 = vmatprep.subr.mxu0 0.0
    %343 = vmatpush1.msra.mxu0 0.0
    %344 = vmatprep.subr.mxu0 0.0
    %345 = vmatpush1.msra.mxu0 0.0
    %346 = vmatprep.subr.mxu0 0.0
    %347 = vmatpush1.msra.mxu0 0.0
    %348 = vmatprep.subr.mxu0 0.0
    %349 = vmatpush1.msra.mxu0 0.0
    %350 = vmatprep.subr.mxu0 0.0
    %351 = vmatpush1.msra.mxu0 0.0
    %352 = vmatprep.subr.mxu0 0.0
    %353 = vmatpush1.msra.mxu0 0.0
    %354 = vmatprep.subr.mxu0 0.0
    %355 = vmatpush1.msra.mxu0 %v322
    %356 = vmatprep.subr.mxu0 0.0
    %357 = vmatpush1.msra.mxu0 %v321
    %358 = vmatprep.subr.mxu0 0.0
    %359 = vmatpush1.msra.mxu0 %v320
    %360 = vmatprep.subr.mxu0 0.0
    %361 = vmatpush1.msra.mxu0 %v319
    %362 = vmatprep.subr.mxu0 0.0
    %363 = vmatpush2.msra.mxu0 0.0
    %364 = vmatprep.subr.mxu0 0.0
    %365 = vmatpush2.msra.mxu0 0.0
    %366 = vmatprep.subr.mxu0 0.0
    %367 = vmatpush2.msra.mxu0 0.0
    %368 = vmatprep.subr.mxu0 0.0
    %369 = vmatpush2.msra.mxu0 0.0
    %370 = vmatprep.subr.mxu0 0.0
    %371 = vmatpush2.msra.mxu0 0.0
    %372 = vmatprep.subr.mxu0 0.0
    %373 = vmatpush2.msra.mxu0 0.0
    %374 = vmatprep.subr.mxu0 0.0
    %375 = vmatpush2.msra.mxu0 0.0
    %376 = vmatprep.subr.mxu0 0.0
    %377 = vmatpush2.msra.mxu0 0.0
    %378 = vmatprep.subr.mxu0 0.0
    %379 = vmatpush2.msra.mxu0 0.0
    %380 = vmatprep.subr.mxu0 0.0
    %381 = vmatpush2.msra.mxu0 0.0
    %382 = vmatprep.subr.mxu0 0.0
    %383 = vmatpush2.msra.mxu0 0.0
    %384 = vmatprep.subr.mxu0 0.0
    %385 = vmatpush2.msra.mxu0 0.0
    %386 = vmatprep.subr.mxu0 0.0
    %387 = vmatpush2.msra.mxu0 0.0
    %388 = vmatprep.subr.mxu0 0.0
    %389 = vmatpush2.msra.mxu0 0.0
    %390 = vmatprep.subr.mxu0 0.0
    %391 = vmatpush2.msra.mxu0 0.0
    %392 = vmatprep.subr.mxu0 0.0
    %393 = vmatpush2.msra.mxu0 0.0
    %394 = vmatprep.mubr.f32.mxu0 0.0
    %395 = vmatmul.mubr.f32.gmra.mxu0 %v70
    %v396 = vpop.f32.mrf.mxu0
    %v397 = vadd.f32 %v328, %v396
    %v398 = vpop.f32.mrf.mxu0
    %399 = vdwg.mxu0
    %v400 = vmax.f32 %v397, 0.0
    %v401 = vld [vmem:[%s7] sm:$0xff]
    %v402 = vld [vmem:[%s7 + $0x8] sm:$0xff]
    %v403 = vld [vmem:[%s7 + $0x10] sm:$0xff]
    %v404 = vld [vmem:[%s7 + $0x18] sm:$0xff]
    %v405 = vld [vmem:[%s7 + $0x20] sm:$0xff]
    %v406 = vld [vmem:[%s7 + $0x28] sm:$0xff]
    %v407 = vld [vmem:[%s7 + $0x30] sm:$0xff]
    %v408 = vld [vmem:[%s7 + $0x38] sm:$0xff]
    %v409 = vld [vmem:[%s8] sm:$0x1]
    %v411 = vlaneseq
    %v412 = vshrl.u32 %v411, 7
    %v413 = vsub.s32 0, %v412
    %v414 = vrot.slane %v409, %v413
    %vm416 = vcmask 523264
    %v418 = vsel %vm416, %v400, 0
    %420 = vmatprep.subr.mxu0 0.0
    %421 = vmatpush1.msra.mxu0 0.0
    %422 = vmatprep.subr.mxu0 0.0
    %423 = vmatpush1.msra.mxu0 0.0
    %424 = vmatprep.subr.mxu0 0.0
    %425 = vmatpush1.msra.mxu0 0.0
    %426 = vmatprep.subr.mxu0 0.0
    %427 = vmatpush1.msra.mxu0 0.0
    %428 = vmatprep.subr.mxu0 0.0
    %429 = vmatpush1.msra.mxu0 0.0
    %430 = vmatprep.subr.mxu0 0.0
    %431 = vmatpush1.msra.mxu0 0.0
    %432 = vmatprep.subr.mxu0 0.0
    %433 = vmatpush1.msra.mxu0 0.0
    %434 = vmatprep.subr.mxu0 0.0
    %435 = vmatpush1.msra.mxu0 0.0
    %436 = vmatprep.subr.mxu0 0.0
    %437 = vmatpush1.msra.mxu0 %v408
    %438 = vmatprep.subr.mxu0 0.0
    %439 = vmatpush1.msra.mxu0 %v407
    %440 = vmatprep.subr.mxu0 0.0
    %441 = vmatpush1.msra.mxu0 %v406
    %442 = vmatprep.subr.mxu0 0.0
    %443 = vmatpush1.msra.mxu0 %v405
    %444 = vmatprep.subr.mxu0 0.0
    %445 = vmatpush1.msra.mxu0 %v404
    %446 = vmatprep.subr.mxu0 0.0
    %447 = vmatpush1.msra.mxu0 %v403
    %448 = vmatprep.subr.mxu0 0.0
    %449 = vmatpush1.msra.mxu0 %v402
    %450 = vmatprep.subr.mxu0 0.0
    %451 = vmatpush1.msra.mxu0 %v401
    %452 = vmatprep.subr.mxu0 0.0
    %453 = vmatpush2.msra.mxu0 0.0
    %454 = vmatprep.subr.mxu0 0.0
    %455 = vmatpush2.msra.mxu0 0.0
    %456 = vmatprep.subr.mxu0 0.0
    %457 = vmatpush2.msra.mxu0 0.0
    %458 = vmatprep.subr.mxu0 0.0
    %459 = vmatpush2.msra.mxu0 0.0
    %460 = vmatprep.subr.mxu0 0.0
    %461 = vmatpush2.msra.mxu0 0.0
    %462 = vmatprep.subr.mxu0 0.0
    %463 = vmatpush2.msra.mxu0 0.0
    %464 = vmatprep.subr.mxu0 0.0
    %465 = vmatpush2.msra.mxu0 0.0
    %466 = vmatprep.subr.mxu0 0.0
    %467 = vmatpush2.msra.mxu0 0.0
    %468 = vmatprep.subr.mxu0 0.0
    %469 = vmatpush2.msra.mxu0 0.0
    %470 = vmatprep.subr.mxu0 0.0
    %471 = vmatpush2.msra.mxu0 0.0
    %472 = vmatprep.subr.mxu0 0.0
    %473 = vmatpush2.msra.mxu0 0.0
    %474 = vmatprep.subr.mxu0 0.0
    %475 = vmatpush2.msra.mxu0 0.0
    %476 = vmatprep.subr.mxu0 0.0
    %477 = vmatpush2.msra.mxu0 0.0
    %478 = vmatprep.subr.mxu0 0.0
    %479 = vmatpush2.msra.mxu0 0.0
    %480 = vmatprep.subr.mxu0 0.0
    %481 = vmatpush2.msra.mxu0 0.0
    %482 = vmatprep.subr.mxu0 0.0
    %483 = vmatpush2.msra.mxu0 0.0
    %484 = vmatprep.mubr.f32.mxu0 0.0
    %485 = vmatmul.mubr.f32.gmra.mxu0 %v418
    %v486 = vpop.f32.mrf.mxu0
    %v487 = vadd.f32 %v414, %v486
    %v488 = vpop.f32.mrf.mxu0
    %489 = vdwg.mxu0
    %v490 = vmax.f32 %v487, 0.0
    %v491 = vld [vmem:[%s10] sm:$0x1]
    %v493 = vsel %vm68, %v491, 0
    %v496 = vsel %vm68, %v490, 0
    %498 = vmatprep.subr.mxu0 0.0
    %499 = vmatpush1.xpose.msra.mxu0 0.0
    %500 = vmatprep.subr.mxu0 0.0
    %501 = vmatpush1.xpose.msra.mxu0 0.0
    %502 = vmatprep.subr.mxu0 0.0
    %503 = vmatpush1.xpose.msra.mxu0 0.0
    %504 = vmatprep.subr.mxu0 0.0
    %505 = vmatpush1.xpose.msra.mxu0 0.0
    %506 = vmatprep.subr.mxu0 0.0
    %507 = vmatpush1.xpose.msra.mxu0 0.0
    %508 = vmatprep.subr.mxu0 0.0
    %509 = vmatpush1.xpose.msra.mxu0 0.0
    %510 = vmatprep.subr.mxu0 0.0
    %511 = vmatpush1.xpose.msra.mxu0 0.0
    %512 = vmatprep.subr.mxu0 0.0
    %513 = vmatpush1.xpose.msra.mxu0 0.0
    %514 = vmatprep.subr.mxu0 0.0
    %515 = vmatpush1.xpose.msra.mxu0 0.0
    %516 = vmatprep.subr.mxu0 0.0
    %517 = vmatpush1.xpose.msra.mxu0 0.0
    %518 = vmatprep.subr.mxu0 0.0
    %519 = vmatpush1.xpose.msra.mxu0 0.0
    %520 = vmatprep.subr.mxu0 0.0
    %521 = vmatpush1.xpose.msra.mxu0 0.0
    %522 = vmatprep.subr.mxu0 0.0
    %523 = vmatpush1.xpose.msra.mxu0 0.0
    %524 = vmatprep.subr.mxu0 0.0
    %525 = vmatpush1.xpose.msra.mxu0 0.0
    %526 = vmatprep.subr.mxu0 0.0
    %527 = vmatpush1.xpose.msra.mxu0 0.0
    %528 = vmatprep.subr.mxu0 0.0
    %529 = vmatpush1.xpose.msra.mxu0 %v496
    %530 = vmatprep.subr.mxu0 0.0
    %531 = vmatpush2.xpose.msra.mxu0 0.0
    %532 = vmatprep.subr.mxu0 0.0
    %533 = vmatpush2.xpose.msra.mxu0 0.0
    %534 = vmatprep.subr.mxu0 0.0
    %535 = vmatpush2.xpose.msra.mxu0 0.0
    %536 = vmatprep.subr.mxu0 0.0
    %537 = vmatpush2.xpose.msra.mxu0 0.0
    %538 = vmatprep.subr.mxu0 0.0
    %539 = vmatpush2.xpose.msra.mxu0 0.0
    %540 = vmatprep.subr.mxu0 0.0
    %541 = vmatpush2.xpose.msra.mxu0 0.0
    %542 = vmatprep.subr.mxu0 0.0
    %543 = vmatpush2.xpose.msra.mxu0 0.0
    %544 = vmatprep.subr.mxu0 0.0
    %545 = vmatpush2.xpose.msra.mxu0 0.0
    %546 = vmatprep.subr.mxu0 0.0
    %547 = vmatpush2.xpose.msra.mxu0 0.0
    %548 = vmatprep.subr.mxu0 0.0
    %549 = vmatpush2.xpose.msra.mxu0 0.0
    %550 = vmatprep.subr.mxu0 0.0
    %551 = vmatpush2.xpose.msra.mxu0 0.0
    %552 = vmatprep.subr.mxu0 0.0
    %553 = vmatpush2.xpose.msra.mxu0 0.0
    %554 = vmatprep.subr.mxu0 0.0
    %555 = vmatpush2.xpose.msra.mxu0 0.0
    %556 = vmatprep.subr.mxu0 0.0
    %557 = vmatpush2.xpose.msra.mxu0 0.0
    %558 = vmatprep.subr.mxu0 0.0
    %559 = vmatpush2.xpose.msra.mxu0 0.0
    %560 = vmatprep.subr.mxu0 0.0
    %561 = vmatpush2.xpose.msra.mxu0 0.0
    %562 = vmatprep.mubr.f32.mxu0 0.0
    %563 = vmatmul.mubr.f32.gmra.mxu0 %v493
    %v564 = vpop.f32.mrf.mxu0
    %v565 = vadd.f32 0.0, %v564
    %v566 = vpop.f32.mrf.mxu0
    %567 = vdwg.mxu0
    %v568 = vadd.f32 %v316, %v565
    %v569 = vxor.u32 %v568, 2147483648
    %v570 = vmul.f32 %v569, 1.442695
    %v571 = vpow.pop %v570
    %v572 = vadd.f32 %v571, 1.0
    %v573 = vrcp.pop %v572
    %v574 = vmul.f32 1.0, %v573
    %vm575 = vcmask 57344
    %576 = vst.msk [vmem:[#allocation6] sm:$0x1] %vm575, %v574
    // Predicated region
    $region54: #{tpu_custom_call.1} parent=1 // pred_check
      _
    $region55: #{tpu_custom_call.1} parent=1 // pred_check_branch
      %578 = sbr.rel (0) target = $region57
    $region56: #{tpu_custom_call.1} parent=1 // pred_region
      %s580 = ssub.s32 16, 16
      %581 = vsyncadd [#allocation5], %s580
      %s583 = sshll.u32 [#allocation6], 4
      %s584 = int_to_ptr.vmem [resolvable:$true] %s583
      %586 = dma.vmem_to_hbm [thread:$0]  %s584, 16, %s12, [#allocation5]
    $region57: #{tpu_custom_call.1} parent=1 // pred_fallthru
      _
    // Predicated region
    $region58: #{tpu_custom_call.1} parent=1 // pred_check
      _
    $region59: #{tpu_custom_call.1} parent=1 // pred_check_branch
      %588 = sbr.rel (0) target = $region61
    $region60: #{tpu_custom_call.1} parent=1 // pred_region
      %589 = dma.done [#allocation5], 16
    $region61: #{tpu_custom_call.1} parent=1 // pred_fallthru
      _
    %590 = vsyncpa [#allocation4], 1
    %591 = vsyncpa [#allocation5], 1

// kernel: tpu_custom_call.1
$region0: #{tpu_custom_call.1}
  #allocation0 [shape = 'u32[]', space=smem, size = 0x4, offset = 0x4, fixed_abs, tag = 'smem constant byte address 0x4 - core index']
  #allocation1 [shape = 'u32[144,128]{1,0:T(1,128)}', space=vmem, size = 0x12000, scoped, tag = 'internal scratch']
  #allocation2 [shape = 'f32[1,1]{1,0:T(1,128)S(1)}', space=vmem, size = 0x200, scoped, tag = 'scoped memory for tpu_custom_call.1']
  %s0 = inlined_call_operand.hbm [shape: f32[8,32], index: 0, kind: input, shape index: {}]
  %s1 = inlined_call_operand.vmem [shape: f32[32,32], index: 1, kind: input, shape index: {}]
  %s2 = inlined_call_operand.vmem [shape: f32[1,32], index: 2, kind: input, shape index: {}]
  %s3 = inlined_call_operand.vmem [shape: f32[32,32], index: 3, kind: input, shape index: {}]
  %s4 = inlined_call_operand.vmem [shape: f32[1,32], index: 4, kind: input, shape index: {}]
  %s5 = inlined_call_operand.vmem [shape: f32[32,64], index: 5, kind: input, shape index: {}]
  %s6 = inlined_call_operand.vmem [shape: f32[1,64], index: 6, kind: input, shape index: {}]
  %s7 = inlined_call_operand.vmem [shape: f32[64,32], index: 7, kind: input, shape index: {}]
  %s8 = inlined_call_operand.vmem [shape: f32[1,32], index: 8, kind: input, shape index: {}]
  %s9 = inlined_call_operand.vmem [shape: f32[1,32], index: 9, kind: input, shape index: {}]
  %s10 = inlined_call_operand.vmem [shape: f32[1,32], index: 10, kind: input, shape index: {}]
  %s11 = inlined_call_operand.<no memory space> [shape: f32[1,1], index: 11, kind: input, shape index: {}]
  %s12 = inlined_call_operand.hbm [shape: f32[1,8], index: 12, kind: output, shape index: {}]
  %s13 = sld [smem:[#allocation0]]
  $region62: #{tpu_custom_call.1} parent=0
    _
  %s15 = ssub.s32 1, %s13
  %s16 = scalar_select 0, %s15, %s13
  %v17 = vstv %s11
  %18 = vst [vmem:[#allocation2] sm:$0x1] %v17
  $region1: #{tpu_custom_call.1} parent=0
    #allocation3 [shape = 'u8[4096]{0}', space=vmem, size = 0x1000, scoped, tag = 'input window, operand 0, single buffered']
    #allocation4 [shape = 's32[1]{0}', space=sflag, size = 0x4, scoped, tag = 'scoped memory for tpu_custom_call.1']
    #allocation5 [shape = 's32[1]{0}', space=sflag, size = 0x4, scoped, tag = 'scoped memory for tpu_custom_call.1']
    #allocation6 [shape = 'u8[512]{0}', space=vmem, size = 0x400, scoped, tag = 'output window, operand 0, single buffered']
    %19 = vsyncpa [#allocation4], 0
    %20 = vsyncpa [#allocation5], 0
    // Predicated region
    $region2: #{tpu_custom_call.1} parent=1 // pred_check
      _
    $region3: #{tpu_custom_call.1} parent=1 // pred_check_branch
      %22 = sbr.rel (0) target = $region5
    $region4: #{tpu_custom_call.1} parent=1 // pred_region
      %s24 = ssub.s32 128, 128
      %25 = vsyncadd [#allocation4], %s24
      %s27 = sshll.u32 [#allocation3], 4
      %s28 = int_to_ptr.vmem [resolvable:$true] %s27
      %30 = dma.hbm_to_vmem [thread:$0]  %s0, 128, %s28, [#allocation4]
    $region5: #{tpu_custom_call.1} parent=1 // pred_fallthru
      _
    // Predicated region
    $region6: #{tpu_custom_call.1} parent=1 // pred_check
      _
    $region7: #{tpu_custom_call.1} parent=1 // pred_check_branch
      %32 = sbr.rel (0) target = $region9
    $region8: #{tpu_custom_call.1} parent=1 // pred_region
      _
    $region9: #{tpu_custom_call.1} parent=1 // pred_fallthru
      _
    // Predicated region
    $region10: #{tpu_custom_call.1} parent=1 // pred_check
      _
    $region11: #{tpu_custom_call.1} parent=1 // pred_check_branch
      %34 = sbr.rel (0) target = $region13
    $region12: #{tpu_custom_call.1} parent=1 // pred_region
      _
    $region13: #{tpu_custom_call.1} parent=1 // pred_fallthru
      _
    // Predicated region
    $region14: #{tpu_custom_call.1} parent=1 // pred_check
      _
    $region15: #{tpu_custom_call.1} parent=1 // pred_check_branch
      %36 = sbr.rel (0) target = $region17
    $region16: #{tpu_custom_call.1} parent=1 // pred_region
      _
    $region17: #{tpu_custom_call.1} parent=1 // pred_fallthru
      _
    // Predicated region
    $region18: #{tpu_custom_call.1} parent=1 // pred_check
      _
    $region19: #{tpu_custom_call.1} parent=1 // pred_check_branch
      %38 = sbr.rel (0) target = $region21
    $region20: #{tpu_custom_call.1} parent=1 // pred_region
      _
    $region21: #{tpu_custom_call.1} parent=1 // pred_fallthru
      _
    // Predicated region
    $region22: #{tpu_custom_call.1} parent=1 // pred_check
      _
    $region23: #{tpu_custom_call.1} parent=1 // pred_check_branch
      %40 = sbr.rel (0) target = $region25
    $region24: #{tpu_custom_call.1} parent=1 // pred_region
      _
    $region25: #{tpu_custom_call.1} parent=1 // pred_fallthru
      _
    // Predicated region
    $region26: #{tpu_custom_call.1} parent=1 // pred_check
      _
    $region27: #{tpu_custom_call.1} parent=1 // pred_check_branch
      %42 = sbr.rel (0) target = $region29
    $region28: #{tpu_custom_call.1} parent=1 // pred_region
      _
    $region29: #{tpu_custom_call.1} parent=1 // pred_fallthru
      _
    // Predicated region
    $region30: #{tpu_custom_call.1} parent=1 // pred_check
      _
    $region31: #{tpu_custom_call.1} parent=1 // pred_check_branch
      %44 = sbr.rel (0) target = $region33
    $region32: #{tpu_custom_call.1} parent=1 // pred_region
      _
    $region33: #{tpu_custom_call.1} parent=1 // pred_fallthru
      _
    // Predicated region
    $region34: #{tpu_custom_call.1} parent=1 // pred_check
      _
    $region35: #{tpu_custom_call.1} parent=1 // pred_check_branch
      %46 = sbr.rel (0) target = $region37
    $region36: #{tpu_custom_call.1} parent=1 // pred_region
      _
    $region37: #{tpu_custom_call.1} parent=1 // pred_fallthru
      _
    // Predicated region
    $region38: #{tpu_custom_call.1} parent=1 // pred_check
      _
    $region39: #{tpu_custom_call.1} parent=1 // pred_check_branch
      %48 = sbr.rel (0) target = $region41
    $region40: #{tpu_custom_call.1} parent=1 // pred_region
      _
    $region41: #{tpu_custom_call.1} parent=1 // pred_fallthru
      _
    // Predicated region
    $region42: #{tpu_custom_call.1} parent=1 // pred_check
      _
    $region43: #{tpu_custom_call.1} parent=1 // pred_check_branch
      %50 = sbr.rel (0) target = $region45
    $region44: #{tpu_custom_call.1} parent=1 // pred_region
      _
    $region45: #{tpu_custom_call.1} parent=1 // pred_fallthru
      _
    // Predicated region
    $region46: #{tpu_custom_call.1} parent=1 // pred_check
      _
    $region47: #{tpu_custom_call.1} parent=1 // pred_check_branch
      %52 = sbr.rel (0) target = $region49
    $region48: #{tpu_custom_call.1} parent=1 // pred_region
      _
    $region49: #{tpu_custom_call.1} parent=1 // pred_fallthru
      _
    // Predicated region
    $region50: #{tpu_custom_call.1} parent=1 // pred_check
      _
    $region51: #{tpu_custom_call.1} parent=1 // pred_check_branch
      %54 = sbr.rel (0) target = $region53
    $region52: #{tpu_custom_call.1} parent=1 // pred_region
      %55 = dma.done [#allocation4], 128
    $region53: #{tpu_custom_call.1} parent=1 // pred_fallthru
      _
    %v56 = vld [vmem:[#allocation3] sm:$0xff]
    %v57 = vld [vmem:[%s1] sm:$0xff]
    %v58 = vld [vmem:[%s1 + $0x8] sm:$0xff]
    %v59 = vld [vmem:[%s1 + $0x10] sm:$0xff]
    %v60 = vld [vmem:[%s1 + $0x18] sm:$0xff]
    %v61 = vld [vmem:[%s2] sm:$0x1]
    %v63 = vlaneseq
    %v64 = vshrl.u32 %v63, 7
    %v65 = vsub.s32 0, %v64
    %v66 = vrot.slane %v61, %v65
    %vm68 = vcmask 261120
    %v70 = vsel %vm68, %v56, 0
    %72 = vmatprep.subr.mxu0 0.0
    %73 = vmatpush1.msra.mxu0 0.0
    %74 = vmatprep.subr.mxu0 0.0
    %75 = vmatpush1.msra.mxu0 0.0
    %76 = vmatprep.subr.mxu0 0.0
    %77 = vmatpush1.msra.mxu0 0.0
    %78 = vmatprep.subr.mxu0 0.0
    %79 = vmatpush1.msra.mxu0 0.0
    %80 = vmatprep.subr.mxu0 0.0
    %81 = vmatpush1.msra.mxu0 0.0
    %82 = vmatprep.subr.mxu0 0.0
    %83 = vmatpush1.msra.mxu0 0.0
    %84 = vmatprep.subr.mxu0 0.0
    %85 = vmatpush1.msra.mxu0 0.0
    %86 = vmatprep.subr.mxu0 0.0
    %87 = vmatpush1.msra.mxu0 0.0
    %88 = vmatprep.subr.mxu0 0.0
    %89 = vmatpush1.msra.mxu0 0.0
    %90 = vmatprep.subr.mxu0 0.0
    %91 = vmatpush1.msra.mxu0 0.0
    %92 = vmatprep.subr.mxu0 0.0
    %93 = vmatpush1.msra.mxu0 0.0
    %94 = vmatprep.subr.mxu0 0.0
    %95 = vmatpush1.msra.mxu0 0.0
    %96 = vmatprep.subr.mxu0 0.0
    %97 = vmatpush1.msra.mxu0 %v60
    %98 = vmatprep.subr.mxu0 0.0
    %99 = vmatpush1.msra.mxu0 %v59
    %100 = vmatprep.subr.mxu0 0.0
    %101 = vmatpush1.msra.mxu0 %v58
    %102 = vmatprep.subr.mxu0 0.0
    %103 = vmatpush1.msra.mxu0 %v57
    %104 = vmatprep.subr.mxu0 0.0
    %105 = vmatpush2.msra.mxu0 0.0
    %106 = vmatprep.subr.mxu0 0.0
    %107 = vmatpush2.msra.mxu0 0.0
    %108 = vmatprep.subr.mxu0 0.0
    %109 = vmatpush2.msra.mxu0 0.0
    %110 = vmatprep.subr.mxu0 0.0
    %111 = vmatpush2.msra.mxu0 0.0
    %112 = vmatprep.subr.mxu0 0.0
    %113 = vmatpush2.msra.mxu0 0.0
    %114 = vmatprep.subr.mxu0 0.0
    %115 = vmatpush2.msra.mxu0 0.0
    %116 = vmatprep.subr.mxu0 0.0
    %117 = vmatpush2.msra.mxu0 0.0
    %118 = vmatprep.subr.mxu0 0.0
    %119 = vmatpush2.msra.mxu0 0.0
    %120 = vmatprep.subr.mxu0 0.0
    %121 = vmatpush2.msra.mxu0 0.0
    %122 = vmatprep.subr.mxu0 0.0
    %123 = vmatpush2.msra.mxu0 0.0
    %124 = vmatprep.subr.mxu0 0.0
    %125 = vmatpush2.msra.mxu0 0.0
    %126 = vmatprep.subr.mxu0 0.0
    %127 = vmatpush2.msra.mxu0 0.0
    %128 = vmatprep.subr.mxu0 0.0
    %129 = vmatpush2.msra.mxu0 0.0
    %130 = vmatprep.subr.mxu0 0.0
    %131 = vmatpush2.msra.mxu0 0.0
    %132 = vmatprep.subr.mxu0 0.0
    %133 = vmatpush2.msra.mxu0 0.0
    %134 = vmatprep.subr.mxu0 0.0
    %135 = vmatpush2.msra.mxu0 0.0
    %136 = vmatprep.mubr.f32.mxu0 0.0
    %137 = vmatmul.mubr.f32.gmra.mxu0 %v70
    %v138 = vpop.f32.mrf.mxu0
    %v139 = vadd.f32 %v66, %v138
    %v140 = vpop.f32.mrf.mxu0
    %141 = vdwg.mxu0
    %v142 = vmax.f32 %v139, 0.0
    %v143 = vmul.f32 %v56, %v142
    %v144 = vadd.f32 %v143, %v56
    %v145 = vld [vmem:[%s3] sm:$0xff]
    %v146 = vld [vmem:[%s3 + $0x8] sm:$0xff]
    %v147 = vld [vmem:[%s3 + $0x10] sm:$0xff]
    %v148 = vld [vmem:[%s3 + $0x18] sm:$0xff]
    %v149 = vld [vmem:[%s4] sm:$0x1]
    %v151 = vlaneseq
    %v152 = vshrl.u32 %v151, 7
    %v153 = vsub.s32 0, %v152
    %v154 = vrot.slane %v149, %v153
    %v157 = vsel %vm68, %v144, 0
    %159 = vmatprep.subr.mxu0 0.0
    %160 = vmatpush1.msra.mxu0 0.0
    %161 = vmatprep.subr.mxu0 0.0
    %162 = vmatpush1.msra.mxu0 0.0
    %163 = vmatprep.subr.mxu0 0.0
    %164 = vmatpush1.msra.mxu0 0.0
    %165 = vmatprep.subr.mxu0 0.0
    %166 = vmatpush1.msra.mxu0 0.0
    %167 = vmatprep.subr.mxu0 0.0
    %168 = vmatpush1.msra.mxu0 0.0
    %169 = vmatprep.subr.mxu0 0.0
    %170 = vmatpush1.msra.mxu0 0.0
    %171 = vmatprep.subr.mxu0 0.0
    %172 = vmatpush1.msra.mxu0 0.0
    %173 = vmatprep.subr.mxu0 0.0
    %174 = vmatpush1.msra.mxu0 0.0
    %175 = vmatprep.subr.mxu0 0.0
    %176 = vmatpush1.msra.mxu0 0.0
    %177 = vmatprep.subr.mxu0 0.0
    %178 = vmatpush1.msra.mxu0 0.0
    %179 = vmatprep.subr.mxu0 0.0
    %180 = vmatpush1.msra.mxu0 0.0
    %181 = vmatprep.subr.mxu0 0.0
    %182 = vmatpush1.msra.mxu0 0.0
    %183 = vmatprep.subr.mxu0 0.0
    %184 = vmatpush1.msra.mxu0 %v148
    %185 = vmatprep.subr.mxu0 0.0
    %186 = vmatpush1.msra.mxu0 %v147
    %187 = vmatprep.subr.mxu0 0.0
    %188 = vmatpush1.msra.mxu0 %v146
    %189 = vmatprep.subr.mxu0 0.0
    %190 = vmatpush1.msra.mxu0 %v145
    %191 = vmatprep.subr.mxu0 0.0
    %192 = vmatpush2.msra.mxu0 0.0
    %193 = vmatprep.subr.mxu0 0.0
    %194 = vmatpush2.msra.mxu0 0.0
    %195 = vmatprep.subr.mxu0 0.0
    %196 = vmatpush2.msra.mxu0 0.0
    %197 = vmatprep.subr.mxu0 0.0
    %198 = vmatpush2.msra.mxu0 0.0
    %199 = vmatprep.subr.mxu0 0.0
    %200 = vmatpush2.msra.mxu0 0.0
    %201 = vmatprep.subr.mxu0 0.0
    %202 = vmatpush2.msra.mxu0 0.0
    %203 = vmatprep.subr.mxu0 0.0
    %204 = vmatpush2.msra.mxu0 0.0
    %205 = vmatprep.subr.mxu0 0.0
    %206 = vmatpush2.msra.mxu0 0.0
    %207 = vmatprep.subr.mxu0 0.0
    %208 = vmatpush2.msra.mxu0 0.0
    %209 = vmatprep.subr.mxu0 0.0
    %210 = vmatpush2.msra.mxu0 0.0
    %211 = vmatprep.subr.mxu0 0.0
    %212 = vmatpush2.msra.mxu0 0.0
    %213 = vmatprep.subr.mxu0 0.0
    %214 = vmatpush2.msra.mxu0 0.0
    %215 = vmatprep.subr.mxu0 0.0
    %216 = vmatpush2.msra.mxu0 0.0
    %217 = vmatprep.subr.mxu0 0.0
    %218 = vmatpush2.msra.mxu0 0.0
    %219 = vmatprep.subr.mxu0 0.0
    %220 = vmatpush2.msra.mxu0 0.0
    %221 = vmatprep.subr.mxu0 0.0
    %222 = vmatpush2.msra.mxu0 0.0
    %223 = vmatprep.mubr.f32.mxu0 0.0
    %224 = vmatmul.mubr.f32.gmra.mxu0 %v157
    %v225 = vpop.f32.mrf.mxu0
    %v226 = vadd.f32 %v154, %v225
    %v227 = vpop.f32.mrf.mxu0
    %228 = vdwg.mxu0
    %v229 = vmax.f32 %v226, 0.0
    %v230 = vmul.f32 %v56, %v229
    %v231 = vadd.f32 %v230, %v144
    %v232 = vld [vmem:[%s9] sm:$0x1]
    %v233 = vld [vmem:[#allocation2] sm:$0x1]
    %235 = vset.pattern.permute.xlu0 0
    %236 = vperm.xlu0 %235, %v233
    %v237 = vpop.permute.xlu0 %236
    %v239 = vlaneseq
    %v240 = vshrl.u32 %v239, 7
    %v241 = vsub.s32 0, %v240
    %v242 = vrot.slane %v237, %v241
    %v244 = vsel %vm68, %v232, 0
    %v247 = vsel %vm68, %v231, 0
    %249 = vmatprep.subr.mxu0 0.0
    %250 = vmatpush1.xpose.msra.mxu0 0.0
    %251 = vmatprep.subr.mxu0 0.0
    %252 = vmatpush1.xpose.msra.mxu0 0.0
    %253 = vmatprep.subr.mxu0 0.0
    %254 = vmatpush1.xpose.msra.mxu0 0.0
    %255 = vmatprep.subr.mxu0 0.0
    %256 = vmatpush1.xpose.msra.mxu0 0.0
    %257 = vmatprep.subr.mxu0 0.0
    %258 = vmatpush1.xpose.msra.mxu0 0.0
    %259 = vmatprep.subr.mxu0 0.0
    %260 = vmatpush1.xpose.msra.mxu0 0.0
    %261 = vmatprep.subr.mxu0 0.0
    %262 = vmatpush1.xpose.msra.mxu0 0.0
    %263 = vmatprep.subr.mxu0 0.0
    %264 = vmatpush1.xpose.msra.mxu0 0.0
    %265 = vmatprep.subr.mxu0 0.0
    %266 = vmatpush1.xpose.msra.mxu0 0.0
    %267 = vmatprep.subr.mxu0 0.0
    %268 = vmatpush1.xpose.msra.mxu0 0.0
    %269 = vmatprep.subr.mxu0 0.0
    %270 = vmatpush1.xpose.msra.mxu0 0.0
    %271 = vmatprep.subr.mxu0 0.0
    %272 = vmatpush1.xpose.msra.mxu0 0.0
    %273 = vmatprep.subr.mxu0 0.0
    %274 = vmatpush1.xpose.msra.mxu0 0.0
    %275 = vmatprep.subr.mxu0 0.0
    %276 = vmatpush1.xpose.msra.mxu0 0.0
    %277 = vmatprep.subr.mxu0 0.0
    %278 = vmatpush1.xpose.msra.mxu0 0.0
    %279 = vmatprep.subr.mxu0 0.0
    %280 = vmatpush1.xpose.msra.mxu0 %v247
    %281 = vmatprep.subr.mxu0 0.0
    %282 = vmatpush2.xpose.msra.mxu0 0.0
    %283 = vmatprep.subr.mxu0 0.0
    %284 = vmatpush2.xpose.msra.mxu0 0.0
    %285 = vmatprep.subr.mxu0 0.0
    %286 = vmatpush2.xpose.msra.mxu0 0.0
    %287 = vmatprep.subr.mxu0 0.0
    %288 = vmatpush2.xpose.msra.mxu0 0.0
    %289 = vmatprep.subr.mxu0 0.0
    %290 = vmatpush2.xpose.msra.mxu0 0.0
    %291 = vmatprep.subr.mxu0 0.0
    %292 = vmatpush2.xpose.msra.mxu0 0.0
    %293 = vmatprep.subr.mxu0 0.0
    %294 = vmatpush2.xpose.msra.mxu0 0.0
    %295 = vmatprep.subr.mxu0 0.0
    %296 = vmatpush2.xpose.msra.mxu0 0.0
    %297 = vmatprep.subr.mxu0 0.0
    %298 = vmatpush2.xpose.msra.mxu0 0.0
    %299 = vmatprep.subr.mxu0 0.0
    %300 = vmatpush2.xpose.msra.mxu0 0.0
    %301 = vmatprep.subr.mxu0 0.0
    %302 = vmatpush2.xpose.msra.mxu0 0.0
    %303 = vmatprep.subr.mxu0 0.0
    %304 = vmatpush2.xpose.msra.mxu0 0.0
    %305 = vmatprep.subr.mxu0 0.0
    %306 = vmatpush2.xpose.msra.mxu0 0.0
    %307 = vmatprep.subr.mxu0 0.0
    %308 = vmatpush2.xpose.msra.mxu0 0.0
    %309 = vmatprep.subr.mxu0 0.0
    %310 = vmatpush2.xpose.msra.mxu0 0.0
    %311 = vmatprep.subr.mxu0 0.0
    %312 = vmatpush2.xpose.msra.mxu0 0.0
    %313 = vmatprep.mubr.f32.mxu0 0.0
    %314 = vmatmul.mubr.f32.gmra.mxu0 %v244
    %v315 = vpop.f32.mrf.mxu0
    %v316 = vadd.f32 %v242, %v315
    %v317 = vpop.f32.mrf.mxu0
    %318 = vdwg.mxu0
    %v319 = vld [vmem:[%s5] sm:$0xff]
    %v320 = vld [vmem:[%s5 + $0x8] sm:$0xff]
    %v321 = vld [vmem:[%s5 + $0x10] sm:$0xff]
    %v322 = vld [vmem:[%s5 + $0x18] sm:$0xff]
    %v323 = vld [vmem:[%s6] sm:$0x1]
    %v325 = vlaneseq
    %v326 = vshrl.u32 %v325, 7
    %v327 = vsub.s32 0, %v326
    %v328 = vrot.slane %v323, %v327
    %330 = vmatprep.subr.mxu0 0.0
    %331 = vmatpush1.msra.mxu0 0.0
    %332 = vmatprep.subr.mxu0 0.0
    %333 = vmatpush1.msra.mxu0 0.0
    %334 = vmatprep.subr.mxu0 0.0
    %335 = vmatpush1.msra.mxu0 0.0
    %336 = vmatprep.subr.mxu0 0.0
    %337 = vmatpush1.msra.mxu0 0.0
    %338 = vmatprep.subr.mxu0 0.0
    %339 = vmatpush1.msra.mxu0 0.0
    %340 = vmatprep.subr.mxu0 0.0
    %341 = vmatpush1.msra.mxu0 0.0
    %342 = vmatprep.subr.mxu0 0.0
    %343 = vmatpush1.msra.mxu0 0.0
    %344 = vmatprep.subr.mxu0 0.0
    %345 = vmatpush1.msra.mxu0 0.0
    %346 = vmatprep.subr.mxu0 0.0
    %347 = vmatpush1.msra.mxu0 0.0
    %348 = vmatprep.subr.mxu0 0.0
    %349 = vmatpush1.msra.mxu0 0.0
    %350 = vmatprep.subr.mxu0 0.0
    %351 = vmatpush1.msra.mxu0 0.0
    %352 = vmatprep.subr.mxu0 0.0
    %353 = vmatpush1.msra.mxu0 0.0
    %354 = vmatprep.subr.mxu0 0.0
    %355 = vmatpush1.msra.mxu0 %v322
    %356 = vmatprep.subr.mxu0 0.0
    %357 = vmatpush1.msra.mxu0 %v321
    %358 = vmatprep.subr.mxu0 0.0
    %359 = vmatpush1.msra.mxu0 %v320
    %360 = vmatprep.subr.mxu0 0.0
    %361 = vmatpush1.msra.mxu0 %v319
    %362 = vmatprep.subr.mxu0 0.0
    %363 = vmatpush2.msra.mxu0 0.0
    %364 = vmatprep.subr.mxu0 0.0
    %365 = vmatpush2.msra.mxu0 0.0
    %366 = vmatprep.subr.mxu0 0.0
    %367 = vmatpush2.msra.mxu0 0.0
    %368 = vmatprep.subr.mxu0 0.0
    %369 = vmatpush2.msra.mxu0 0.0
    %370 = vmatprep.subr.mxu0 0.0
    %371 = vmatpush2.msra.mxu0 0.0
    %372 = vmatprep.subr.mxu0 0.0
    %373 = vmatpush2.msra.mxu0 0.0
    %374 = vmatprep.subr.mxu0 0.0
    %375 = vmatpush2.msra.mxu0 0.0
    %376 = vmatprep.subr.mxu0 0.0
    %377 = vmatpush2.msra.mxu0 0.0
    %378 = vmatprep.subr.mxu0 0.0
    %379 = vmatpush2.msra.mxu0 0.0
    %380 = vmatprep.subr.mxu0 0.0
    %381 = vmatpush2.msra.mxu0 0.0
    %382 = vmatprep.subr.mxu0 0.0
    %383 = vmatpush2.msra.mxu0 0.0
    %384 = vmatprep.subr.mxu0 0.0
    %385 = vmatpush2.msra.mxu0 0.0
    %386 = vmatprep.subr.mxu0 0.0
    %387 = vmatpush2.msra.mxu0 0.0
    %388 = vmatprep.subr.mxu0 0.0
    %389 = vmatpush2.msra.mxu0 0.0
    %390 = vmatprep.subr.mxu0 0.0
    %391 = vmatpush2.msra.mxu0 0.0
    %392 = vmatprep.subr.mxu0 0.0
    %393 = vmatpush2.msra.mxu0 0.0
    %394 = vmatprep.mubr.f32.mxu0 0.0
    %395 = vmatmul.mubr.f32.gmra.mxu0 %v70
    %v396 = vpop.f32.mrf.mxu0
    %v397 = vadd.f32 %v328, %v396
    %v398 = vpop.f32.mrf.mxu0
    %399 = vdwg.mxu0
    %v400 = vmax.f32 %v397, 0.0
    %v401 = vld [vmem:[%s7] sm:$0xff]
    %v402 = vld [vmem:[%s7 + $0x8] sm:$0xff]
    %v403 = vld [vmem:[%s7 + $0x10] sm:$0xff]
    %v404 = vld [vmem:[%s7 + $0x18] sm:$0xff]
    %v405 = vld [vmem:[%s7 + $0x20] sm:$0xff]
    %v406 = vld [vmem:[%s7 + $0x28] sm:$0xff]
    %v407 = vld [vmem:[%s7 + $0x30] sm:$0xff]
    %v408 = vld [vmem:[%s7 + $0x38] sm:$0xff]
    %v409 = vld [vmem:[%s8] sm:$0x1]
    %v411 = vlaneseq
    %v412 = vshrl.u32 %v411, 7
    %v413 = vsub.s32 0, %v412
    %v414 = vrot.slane %v409, %v413
    %vm416 = vcmask 523264
    %v418 = vsel %vm416, %v400, 0
    %420 = vmatprep.subr.mxu0 0.0
    %421 = vmatpush1.msra.mxu0 0.0
    %422 = vmatprep.subr.mxu0 0.0
    %423 = vmatpush1.msra.mxu0 0.0
    %424 = vmatprep.subr.mxu0 0.0
    %425 = vmatpush1.msra.mxu0 0.0
    %426 = vmatprep.subr.mxu0 0.0
    %427 = vmatpush1.msra.mxu0 0.0
    %428 = vmatprep.subr.mxu0 0.0
    %429 = vmatpush1.msra.mxu0 0.0
    %430 = vmatprep.subr.mxu0 0.0
    %431 = vmatpush1.msra.mxu0 0.0
    %432 = vmatprep.subr.mxu0 0.0
    %433 = vmatpush1.msra.mxu0 0.0
    %434 = vmatprep.subr.mxu0 0.0
    %435 = vmatpush1.msra.mxu0 0.0
    %436 = vmatprep.subr.mxu0 0.0
    %437 = vmatpush1.msra.mxu0 %v408
    %438 = vmatprep.subr.mxu0 0.0
    %439 = vmatpush1.msra.mxu0 %v407
    %440 = vmatprep.subr.mxu0 0.0
    %441 = vmatpush1.msra.mxu0 %v406
    %442 = vmatprep.subr.mxu0 0.0
    %443 = vmatpush1.msra.mxu0 %v405
    %444 = vmatprep.subr.mxu0 0.0
    %445 = vmatpush1.msra.mxu0 %v404
    %446 = vmatprep.subr.mxu0 0.0
    %447 = vmatpush1.msra.mxu0 %v403
    %448 = vmatprep.subr.mxu0 0.0
    %449 = vmatpush1.msra.mxu0 %v402
    %450 = vmatprep.subr.mxu0 0.0
    %451 = vmatpush1.msra.mxu0 %v401
    %452 = vmatprep.subr.mxu0 0.0
    %453 = vmatpush2.msra.mxu0 0.0
    %454 = vmatprep.subr.mxu0 0.0
    %455 = vmatpush2.msra.mxu0 0.0
    %456 = vmatprep.subr.mxu0 0.0
    %457 = vmatpush2.msra.mxu0 0.0
    %458 = vmatprep.subr.mxu0 0.0
    %459 = vmatpush2.msra.mxu0 0.0
    %460 = vmatprep.subr.mxu0 0.0
    %461 = vmatpush2.msra.mxu0 0.0
    %462 = vmatprep.subr.mxu0 0.0
    %463 = vmatpush2.msra.mxu0 0.0
    %464 = vmatprep.subr.mxu0 0.0
    %465 = vmatpush2.msra.mxu0 0.0
    %466 = vmatprep.subr.mxu0 0.0
    %467 = vmatpush2.msra.mxu0 0.0
    %468 = vmatprep.subr.mxu0 0.0
    %469 = vmatpush2.msra.mxu0 0.0
    %470 = vmatprep.subr.mxu0 0.0
    %471 = vmatpush2.msra.mxu0 0.0
    %472 = vmatprep.subr.mxu0 0.0
    %473 = vmatpush2.msra.mxu0 0.0
    %474 = vmatprep.subr.mxu0 0.0
    %475 = vmatpush2.msra.mxu0 0.0
    %476 = vmatprep.subr.mxu0 0.0
    %477 = vmatpush2.msra.mxu0 0.0
    %478 = vmatprep.subr.mxu0 0.0
    %479 = vmatpush2.msra.mxu0 0.0
    %480 = vmatprep.subr.mxu0 0.0
    %481 = vmatpush2.msra.mxu0 0.0
    %482 = vmatprep.subr.mxu0 0.0
    %483 = vmatpush2.msra.mxu0 0.0
    %484 = vmatprep.mubr.f32.mxu0 0.0
    %485 = vmatmul.mubr.f32.gmra.mxu0 %v418
    %v486 = vpop.f32.mrf.mxu0
    %v487 = vadd.f32 %v414, %v486
    %v488 = vpop.f32.mrf.mxu0
    %489 = vdwg.mxu0
    %v490 = vmax.f32 %v487, 0.0
    %v491 = vld [vmem:[%s10] sm:$0x1]
    %v493 = vsel %vm68, %v491, 0
    %v496 = vsel %vm68, %v490, 0
    %498 = vmatprep.subr.mxu0 0.0
    %499 = vmatpush1.xpose.msra.mxu0 0.0
    %500 = vmatprep.subr.mxu0 0.0
    %501 = vmatpush1.xpose.msra.mxu0 0.0
    %502 = vmatprep.subr.mxu0 0.0
    %503 = vmatpush1.xpose.msra.mxu0 0.0
    %504 = vmatprep.subr.mxu0 0.0
    %505 = vmatpush1.xpose.msra.mxu0 0.0
    %506 = vmatprep.subr.mxu0 0.0
    %507 = vmatpush1.xpose.msra.mxu0 0.0
    %508 = vmatprep.subr.mxu0 0.0
    %509 = vmatpush1.xpose.msra.mxu0 0.0
    %510 = vmatprep.subr.mxu0 0.0
    %511 = vmatpush1.xpose.msra.mxu0 0.0
    %512 = vmatprep.subr.mxu0 0.0
    %513 = vmatpush1.xpose.msra.mxu0 0.0
    %514 = vmatprep.subr.mxu0 0.0
    %515 = vmatpush1.xpose.msra.mxu0 0.0
    %516 = vmatprep.subr.mxu0 0.0
    %517 = vmatpush1.xpose.msra.mxu0 0.0
    %518 = vmatprep.subr.mxu0 0.0
    %519 = vmatpush1.xpose.msra.mxu0 0.0
    %520 = vmatprep.subr.mxu0 0.0
    %521 = vmatpush1.xpose.msra.mxu0 0.0
    %522 = vmatprep.subr.mxu0 0.0
    %523 = vmatpush1.xpose.msra.mxu0 0.0
    %524 = vmatprep.subr.mxu0 0.0
    %525 = vmatpush1.xpose.msra.mxu0 0.0
    %526 = vmatprep.subr.mxu0 0.0
    %527 = vmatpush1.xpose.msra.mxu0 0.0
    %528 = vmatprep.subr.mxu0 0.0
    %529 = vmatpush1.xpose.msra.mxu0 %v496
    %530 = vmatprep.subr.mxu0 0.0
    %531 = vmatpush2.xpose.msra.mxu0 0.0
    %532 = vmatprep.subr.mxu0 0.0
    %533 = vmatpush2.xpose.msra.mxu0 0.0
    %534 = vmatprep.subr.mxu0 0.0
    %535 = vmatpush2.xpose.msra.mxu0 0.0
    %536 = vmatprep.subr.mxu0 0.0
    %537 = vmatpush2.xpose.msra.mxu0 0.0
    %538 = vmatprep.subr.mxu0 0.0
    %539 = vmatpush2.xpose.msra.mxu0 0.0
    %540 = vmatprep.subr.mxu0 0.0
    %541 = vmatpush2.xpose.msra.mxu0 0.0
    %542 = vmatprep.subr.mxu0 0.0
    %543 = vmatpush2.xpose.msra.mxu0 0.0
    %544 = vmatprep.subr.mxu0 0.0
    %545 = vmatpush2.xpose.msra.mxu0 0.0
    %546 = vmatprep.subr.mxu0 0.0
    %547 = vmatpush2.xpose.msra.mxu0 0.0
    %548 = vmatprep.subr.mxu0 0.0
    %549 = vmatpush2.xpose.msra.mxu0 0.0
    %550 = vmatprep.subr.mxu0 0.0
    %551 = vmatpush2.xpose.msra.mxu0 0.0
    %552 = vmatprep.subr.mxu0 0.0
    %553 = vmatpush2.xpose.msra.mxu0 0.0
    %554 = vmatprep.subr.mxu0 0.0
    %555 = vmatpush2.xpose.msra.mxu0 0.0
    %556 = vmatprep.subr.mxu0 0.0
    %557 = vmatpush2.xpose.msra.mxu0 0.0
    %558 = vmatprep.subr.mxu0 0.0
    %559 = vmatpush2.xpose.msra.mxu0 0.0
    %560 = vmatprep.subr.mxu0 0.0
    %561 = vmatpush2.xpose.msra.mxu0 0.0
    %562 = vmatprep.mubr.f32.mxu0 0.0
    %563 = vmatmul.mubr.f32.gmra.mxu0 %v493
    %v564 = vpop.f32.mrf.mxu0
    %v565 = vadd.f32 0.0, %v564
    %v566 = vpop.f32.mrf.mxu0
    %567 = vdwg.mxu0
    %v568 = vadd.f32 %v316, %v565
    %v569 = vxor.u32 %v568, 2147483648
    %v570 = vmul.f32 %v569, 1.442695
    %v571 = vpow.pop %v570
    %v572 = vadd.f32 %v571, 1.0
    %v573 = vrcp.pop %v572
    %v574 = vmul.f32 1.0, %v573
    %vm575 = vcmask 57344
    %576 = vst.msk [vmem:[#allocation6] sm:$0x1] %vm575, %v574
    // Predicated region
    $region54: #{tpu_custom_call.1} parent=1 // pred_check
      _
    $region55: #{tpu_custom_call.1} parent=1 // pred_check_branch
      %578 = sbr.rel (0) target = $region57
    $region56: #{tpu_custom_call.1} parent=1 // pred_region
      %s580 = ssub.s32 16, 16
      %581 = vsyncadd [#allocation5], %s580
      %s583 = sshll.u32 [#allocation6], 4
      %s584 = int_to_ptr.vmem [resolvable:$true] %s583
      %586 = dma.vmem_to_hbm [thread:$0]  %s584, 16, %s12, [#allocation5]
    $region57: #{tpu_custom_call.1} parent=1 // pred_fallthru
      _
    // Predicated region
    $region58: #{tpu_custom_call.1} parent=1 // pred_check
      _
    $region59: #{tpu_custom_call.1} parent=1 // pred_check_branch
      %588 = sbr.rel (0) target = $region61
    $region60: #{tpu_custom_call.1} parent=1 // pred_region
      %589 = dma.done [#allocation5], 16
    $region61: #{tpu_custom_call.1} parent=1 // pred_fallthru
      _
    %590 = vsyncpa [#allocation4], 1
    %591 = vsyncpa [#allocation5], 1

</llo_original>
